<compile_context>
chip_gen: v6e
topology: v6e:2x2x1
jax: 0.10.0
libtpu: 0.0.40
codegen_flags: <defaults>
</compile_context>

<pallas_src>
import math

import numpy as np
import jax
import jax.numpy as jnp
from jax import lax
from jax.experimental import pallas as pl
from jax.experimental.pallas import tpu as pltpu

# -------------------- synthetic, small configuration --------------------
BATCH = 2
SEQ = 16
HIDDEN = 32          # true embed_dim of the aligner cross-attention
HIDDEN_PAD = 128     # lane-dense padded hidden (multiple of 128)
K_TOKENS = 4         # number of implicit tokens (k)
NUM_HEADS = 8        # nn.MultiheadAttention(num_heads=8)
VOCAB = 128          # multiple of 128 -> lane-dense LM-head output
THINK_ID = 124       # tokenizer.convert_tokens_to_ids('<think>')
END_THINK_ID = 125   # tokenizer.convert_tokens_to_ids('</think>')
PAD_ID = 127         # tokenizer.pad_token_id

NEG_INF = np.float32(-1e30)   # f32 masking value (scores/softmax stay f32)


def _round_up(x, m):
    return (x + m - 1) // m * m


# ==================== Pallas kernels ====================
def _aligner_attn_kernel(flags_ref,                                   # scalar prefetch (SMEM)
                         emb_ref, bias_ref,
                         qbig_ref, wkT_ref, wvT_ref, woT_ref,
                         bk_ref, bv_ref, bo_ref, hmask_ref, comb_ref,
                         out_ref):
    """Cross-attention of K learned queries over ONE row's <think> region.

    Grid axis 0 = batch row ("parallel" -> shards across v7x's two TensorCores).
    Head structure is encoded on the host:
      q_big (nh*K, Hp): row h*K+i = q[i] * head_mask_h / sqrt(hd)   (heads on sublanes)
      hmask (nh*K, Hp): 1 on head-h columns for rows of head h, else 0 (padded cols 0)
      comb  (K, nh*K) : comb[i, h*K+i] = 1   (re-concatenates heads with one matmul)
      bias  (1, S)    : 0 inside the open region (start, end), -1e30 elsewhere
    Matmul operands are bf16 with f32 accumulation; softmax math stays f32.
    Rows whose flag is 0 (no / empty <think> region) skip all compute.
    """
    b = pl.program_id(0)
    run = flags_ref[b] != 0

    @pl.when(jnp.logical_not(run))
    def _():
        out_ref[...] = jnp.zeros_like(out_ref)          # discarded downstream, keep it defined

    @pl.when(run)
    def _():
        emb = emb_ref[...].astype(jnp.bfloat16)                                   # (S, Hp)
        # K / V projections for this row only (one (S,Hp)x(Hp,Hp) matmul each).
        k = jnp.dot(emb, wkT_ref[...], preferred_element_type=jnp.float32) + bk_ref[...]
        v = jnp.dot(emb, wvT_ref[...], preferred_element_type=jnp.float32) + bv_ref[...]

        # Per-head scores for ALL heads with one matmul: (nh*K, S).
        scores = lax.dot_general(qbig_ref[...], k.astype(jnp.bfloat16),
                                 (((1,), (1,)), ((), ())),
                                 preferred_element_type=jnp.float32)
        scores = scores + bias_ref[...]                  # (1, S) broadcast: open-region mask

        # Masked softmax over S (f32).
        m = jnp.max(scores, axis=-1, keepdims=True)
        p = jnp.exp(scores - m)
        denom = jnp.sum(p, axis=-1, keepdims=True)
        attn = p * pl.reciprocal(denom, approx=True)     # EUP reciprocal, frees VALU slots

        # Context for all heads: (nh*K, Hp); junk outside each row's head columns.
        ctx_big = jnp.dot(attn.astype(jnp.bfloat16), v.astype(jnp.bfloat16),
                          preferred_element_type=jnp.float32)
        ctx_big = ctx_big * hmask_ref[...]               # zero the cross-head junk

        # Re-concatenate heads with one matmul: (K, Hp).
        ctx = jnp.dot(comb_ref[...], ctx_big.astype(jnp.bfloat16),
                      preferred_element_type=jnp.float32)

        # Output projection (lane-dense (K, Hp) store).
        out_ref[...] = (jnp.dot(ctx.astype(jnp.bfloat16), woT_ref[...],
                                preferred_element_type=jnp.float32) + bo_ref[...])


def _repack_kernel(idx_ref, src_ref, out_ref):
    """out[l, :] = src[idx[b, l], :] -- pure row copies, no one-hot selector / matmul."""
    b = pl.program_id(0)
    L = out_ref.shape[0]
    # L is tiny here; static destination rows, dynamic (SMEM-driven) source rows.
    # TODO(synk): for long sequences replace with chunked pltpu.make_async_copy slabs
    #   (prefix / aligned / suffix are contiguous) instead of per-row copies.
    for l in range(L):
        out_ref[pl.ds(l, 1), :] = src_ref[pl.ds(idx_ref[b, l], 1), :]


def _lm_head_kernel(x_ref, wT_ref, o_ref):
    o_ref[...] = jnp.dot(x_ref[...], wT_ref[...], preferred_element_type=jnp.float32)


# ==================== Pallas wrappers ====================
def aligner_cross_attention(emb_p, attn_bias, flags, c):
    """Returns (B, K, Hp) aligned regions; rows with flag==0 are zeros (discarded)."""
    B, S, Hp = emb_p.shape
    K = K_TOKENS
    M = NUM_HEADS * K
    return pl.pallas_call(
        _aligner_attn_kernel,
        out_shape=jax.ShapeDtypeStruct((B, K, Hp), jnp.float32),
        grid_spec=pltpu.PrefetchScalarGridSpec(
            num_scalar_prefetch=1,
            grid=(B,),
            in_specs=[
                pl.BlockSpec((None, S, Hp), lambda b, f: (b, 0, 0)),   # this row's embeddings
                pl.BlockSpec((None, 1, S), lambda b, f: (b, 0, 0)),    # this row's region bias
                pl.BlockSpec((M, Hp), lambda b, f: (0, 0)),            # q_big (resident)
                pl.BlockSpec((Hp, Hp), lambda b, f: (0, 0)),           # WkT
                pl.BlockSpec((Hp, Hp), lambda b, f: (0, 0)),           # WvT
                pl.BlockSpec((Hp, Hp), lambda b, f: (0, 0)),           # WoT
                pl.BlockSpec((1, Hp), lambda b, f: (0, 0)),            # bk
                pl.BlockSpec((1, Hp), lambda b, f: (0, 0)),            # bv
                pl.BlockSpec((1, Hp), lambda b, f: (0, 0)),            # bo
                pl.BlockSpec((M, Hp), lambda b, f: (0, 0)),            # head mask
                pl.BlockSpec((K, M), lambda b, f: (0, 0)),             # head combiner
            ],
            out_specs=pl.BlockSpec((None, K, Hp), lambda b, f: (b, 0, 0)),
        ),
        compiler_params=pltpu.CompilerParams(
            dimension_semantics=("parallel",),
            vmem_limit_bytes=32 * 1024 * 1024),
    )(flags, emb_p, attn_bias,
      c["q_big"], c["WkT"], c["WvT"], c["WoT"],
      c["bk"], c["bv"], c["bo"], c["hmask"], c["comb"])


def repack_sequences(src, idx):
    """On-device re-packing: copy rows of src (B, T, Hp) per index table idx (B, L)."""
    B, T, Hp = src.shape
    L = idx.shape[1]
    return pl.pallas_call(
        _repack_kernel,
        out_shape=jax.ShapeDtypeStruct((B, L, Hp), src.dtype),
        grid_spec=pltpu.PrefetchScalarGridSpec(
            num_scalar_prefetch=1,
            grid=(B,),
            in_specs=[pl.BlockSpec((None, T, Hp), lambda b, i: (b, 0, 0))],
            out_specs=pl.BlockSpec((None, L, Hp), lambda b, i: (b, 0, 0)),
        ),
        compiler_params=pltpu.CompilerParams(
            dimension_semantics=("parallel",),
            vmem_limit_bytes=32 * 1024 * 1024),
    )(idx, src)


def lm_head(x_bld, lm_head_T_p, *, tm=128, tn=128):
    """Tiled LM projection: vocab outer / M inner so the weight tile is resident across
    the full M sweep; M tiled, V lane-dense (multiple of 128); bf16 operands, f32 acc."""
    B, L, Hp = x_bld.shape
    V = lm_head_T_p.shape[1]
    assert V % 128 == 0, "VOCAB is padded to a multiple of 128 for lane-dense stores"
    M = B * L
    x2 = x_bld.reshape(M, Hp).astype(jnp.bfloat16)

    tm = min(tm, _round_up(M, 8))
    Mp = _round_up(M, tm)
    if Mp != M:
        x2 = jnp.pad(x2, ((0, Mp - M), (0, 0)))
    tn = min(tn, V)

    out = pl.pallas_call(
        _lm_head_kernel,
        grid_spec=pltpu.PrefetchScalarGridSpec(
            num_scalar_prefetch=0,
            grid=(V // tn, Mp // tm),   # j (vocab) outer, i (M) inner: weight tile stays live
            in_specs=[pl.BlockSpec((tm, Hp), lambda j, i: (i, 0)),
                      pl.BlockSpec((Hp, tn), lambda j, i: (0, j))],
            out_specs=pl.BlockSpec((tm, tn), lambda j, i: (i, j)),
        ),
        out_shape=jax.ShapeDtypeStruct((Mp, V), jnp.float32),
        compiler_params=pltpu.CompilerParams(
            dimension_semantics=("parallel", "parallel"),
            vmem_limit_bytes=32 * 1024 * 1024),
    )(x2, lm_head_T_p)
    # TODO(synk): add a K(=Hp) reduction grid axis with an f32 VMEM accumulator +
    #   pl.when init/finalize ("arbitrary" semantics) once hidden grows beyond one block.
    return out[:M].reshape(B, L, V)


# ==================== host-side constant preparation (done once) ====================
def prepare_constants(params):
    """Batch-independent constants: Q projection, head masks, 128-lane zero padding,
    bf16 casts for all MXU operands."""
    H, Hp, K, nh = HIDDEN, HIDDEN_PAD, K_TOKENS, NUM_HEADS
    hd = H // nh
    padH = Hp - H

    def pad2(w):          # (H, H) -> (Hp, Hp), zero padded
        return jnp.pad(w, ((0, padH), (0, padH)))

    def pad_row(b):       # (1, H) -> (1, Hp)
        return jnp.pad(b, ((0, 0), (0, padH)))

    # Q projection is batch-independent -> done here, folded softmax scale.
    q = params["implicit_tokens"] @ params["WqT"] + params["bq"]          # (K, H)
    q = q * (1.0 / math.sqrt(hd))

    head_of_col = np.repeat(np.arange(nh), hd)                            # (H,)
    head_of_row = np.repeat(np.arange(nh), K)                             # (nh*K,)
    hmask = np.zeros((nh * K, Hp), np.float32)
    hmask[:, :H] = (head_of_row[:, None] == head_of_col[None, :]).astype(np.float32)
    comb = (np.arange(nh * K)[None, :] % K == np.arange(K)[:, None]).astype(np.float32)
    q_big = jnp.pad(jnp.tile(q, (nh, 1)), ((0, 0), (0, padH))) * jnp.asarray(hmask)

    return {
        "q_big": q_big.astype(jnp.bfloat16),
        "WkT": pad2(params["WkT"]).astype(jnp.bfloat16),
        "WvT": pad2(params["WvT"]).astype(jnp.bfloat16),
        "WoT": pad2(params["WoT"]).astype(jnp.bfloat16),
        "bk": pad_row(params["bk"]),
        "bv": pad_row(params["bv"]),
        "bo": pad_row(params["bo"]),
        "hmask": jnp.asarray(hmask),
        "comb": jnp.asarray(comb).astype(jnp.bfloat16),
        "embed_p": jnp.pad(params["embed"], ((0, 0), (0, padH))),         # (VOCAB, Hp) f32
        "lm_head_T_p": jnp.pad(params["lm_head_T"],
                               ((0, padH), (0, 0))).astype(jnp.bfloat16),  # (Hp, V)
    }


# ==================== aligner (mirrors ImplicitTokensAligner.forward) ====================
def _find_think_region(ids_row):
    tp = np.nonzero(ids_row == THINK_ID)[0]
    ep = np.nonzero(ids_row == END_THINK_ID)[0]
    # Reference indexes think_positions[2] after only checking len>0; guard <3 to avoid a crash.
    if len(tp) < 3 or len(ep) == 0:
        return None
    start = int(tp[2])
    cand = ep[ep > start]
    if len(cand) == 0:
        return None
    return start, int(cand[-1])


def implicit_tokens_aligner(embeddings_p, input_ids, attention_mask, pad_token_emb_p, consts):
    B, S, Hp = embeddings_p.shape
    K = K_TOKENS
    ids_np = np.asarray(input_ids)            # read-only view is fine, we only read

    # Host-side control flow over token ids (the reference is host-synchronous here too).
    rows = []
    flags = np.zeros((B,), np.int32)
    bias = np.full((B, 1, S), NEG_INF, np.float32)
    for i in range(B):
        r = _find_think_region(ids_np[i])
        if r is None:
            rows.append(("none", 0, 0))
            continue
        s, e = r
        if e - s - 1 == 0:
            rows.append(("empty", s, e))
        else:
            rows.append(("attn", s, e))
            flags[i] = 1
            bias[i, 0, s + 1:e] = 0.0          # attend only to the open region

    # Pallas cross-attention hot path: one grid step per row, dead rows skipped.
    aligned = aligner_cross_attention(embeddings_p, jnp.asarray(bias),
                                      jnp.asarray(flags), consts)          # (B, K, Hp)

    # Tiny integer gather table on host; the data re-packing stays on device (copies).
    pad_slot = S + K
    idx_rows, new_lens = [], []
    for (mode, s, e) in rows:
        if mode == "none":
            r = list(range(S))
        elif mode == "empty":
            r = list(range(s)) + list(range(e + 1, S))
        else:
            r = list(range(s)) + list(range(S, S + K)) + list(range(e + 1, S))
        idx_rows.append(r)
        new_lens.append(len(r))
    max_len = max(new_lens)
    idx = np.full((B, max_len), pad_slot, np.int32)
    for i, r in enumerate(idx_rows):
        idx[i, :len(r)] = r
    idx_dev = jnp.asarray(idx)

    # Source = [original embeddings | aligned tokens | pad embedding]; copy-gather on device.
    src = jnp.concatenate(
        [embeddings_p, aligned,
         jnp.broadcast_to(pad_token_emb_p[None, None, :], (B, 1, Hp))], axis=1)
    new_emb = repack_sequences(src, idx_dev)                               # (B, L, Hp)

    mask_src = jnp.concatenate(
        [attention_mask,
         jnp.ones((B, K), attention_mask.dtype),
         jnp.zeros((B, 1), attention_mask.dtype)], axis=1)
    new_mask = jnp.take_along_axis(mask_src, idx_dev, axis=1)

    return new_emb, new_mask, rows, aligned


# ==================== full model forward (ImplicitTokensAlignment.forward) ====================
def implicit_tokens_alignment_forward(params, consts, input_ids, attention_mask, labels=None):
    # 3. input embeddings (gather from the lane-padded table -- plain JAX glue)
    input_embeddings = jnp.take(consts["embed_p"], input_ids, axis=0)      # (B, S, Hp)
    pad_token_emb = consts["embed_p"][PAD_ID]
    # 4. aligner (Pallas cross-attention + Pallas on-device re-packing inside)
    new_emb, new_mask, rows, aligned = implicit_tokens_aligner(
        input_embeddings, input_ids, attention_mask, pad_token_emb, consts)
    # 5. LM.
    # TODO(synk): the pretrained causal-LM transformer stack (+tokenizer) has no clean
    #   in-script Pallas equivalent without a checkpoint; replaced by a synthetic
    #   lm_head projection in a tiled Pallas kernel.  Loss omitted (labels no longer
    #   line up with the re-packed sequence length).
    logits = lm_head(new_emb, consts["lm_head_T_p"])
    return {"logits": logits, "attention_mask": new_mask, "loss": None,
            "_aligned": aligned, "_rows": rows, "_embeddings": new_emb}


# ==================== parameter init (deterministic, synthetic) ====================
def init_params(key):
    ks = jax.random.split(key, 11)
    scale = 1.0 / math.sqrt(HIDDEN)
    return {
        "embed": jax.random.normal(ks[0], (VOCAB, HIDDEN), jnp.float32) * 0.1,
        "implicit_tokens": jax.random.normal(ks[1], (K_TOKENS, HIDDEN), jnp.float32),
        "WqT": jax.random.normal(ks[2], (HIDDEN, HIDDEN), jnp.float32) * scale,   # == Wq.T
        "WkT": jax.random.normal(ks[3], (HIDDEN, HIDDEN), jnp.float32) * scale,
        "WvT": jax.random.normal(ks[4], (HIDDEN, HIDDEN), jnp.float32) * scale,
        "WoT": jax.random.normal(ks[5], (HIDDEN, HIDDEN), jnp.float32) * scale,
        "bq": jax.random.normal(ks[6], (1, HIDDEN), jnp.float32) * 0.01,
        "bk": jax.random.normal(ks[7], (1, HIDDEN), jnp.float32) * 0.01,
        "bv": jax.random.normal(ks[8], (1, HIDDEN), jnp.float32) * 0.01,
        "bo": jax.random.normal(ks[9], (1, HIDDEN), jnp.float32) * 0.01,
        "lm_head_T": jax.random.normal(ks[10], (HIDDEN, VOCAB), jnp.float32) * scale,
    }


def _mha_reference(region, qtok, p):
    """Pure-jnp f32 nn.MultiheadAttention reference restricted to the exact region."""
    q = qtok @ p["WqT"] + p["bq"]
    k = region @ p["WkT"] + p["bk"]
    v = region @ p["WvT"] + p["bv"]
    Kq, H = q.shape
    hd = H // NUM_HEADS
    qh = q.reshape(Kq, NUM_HEADS, hd).transpose(1, 0, 2)
    kh = k.reshape(-1, NUM_HEADS, hd).transpose(1, 0, 2)
    vh = v.reshape(-1, NUM_HEADS, hd).transpose(1, 0, 2)
    s = jnp.einsum("hqd,hkd->hqk", qh, kh) / math.sqrt(hd)
    a = jax.nn.softmax(s, axis=-1)
    ctx = jnp.einsum("hqk,hkd->hqd", a, vh).transpose(1, 0, 2).reshape(Kq, H)
    return ctx @ p["WoT"] + p["bo"]


if __name__ == "__main__":
    key = jax.random.PRNGKey(0)
    kp, ki = jax.random.split(key)
    params = init_params(kp)
    consts = prepare_constants(params)

    # np.array(...) makes a writable host copy (np.asarray of a jax array is read-only).
    ids = np.array(jax.random.randint(ki, (BATCH, SEQ), 0, 120, dtype=jnp.int32))
    # row 0: three <think> tokens (3rd at pos 8) and a </think> at pos 13 -> attention path
    ids[0, 2] = THINK_ID
    ids[0, 5] = THINK_ID
    ids[0, 8] = THINK_ID
    ids[0, 13] = END_THINK_ID
    # row 1: no think region -> fallback path (unchanged sequence)
    input_ids = jnp.asarray(ids)
    attention_mask = jnp.ones((BATCH, SEQ), jnp.int32)

    out = implicit_tokens_alignment_forward(params, consts, input_ids, attention_mask)
    jax.block_until_ready(out["logits"])
    jax.block_until_ready(out["attention_mask"])
    jax.block_until_ready(out["_embeddings"])

    # sanity checks: Pallas kernels vs. pure-jnp f32 reference (slice off the lane padding)
    emb_in = np.asarray(jnp.take(params["embed"], input_ids, axis=0))
    aligned = np.asarray(out["_aligned"])[:, :, :HIDDEN]
    new_emb = np.asarray(out["_embeddings"])[:, :, :HIDDEN]
    for i, (mode, s, e) in enumerate(out["_rows"]):
        if mode == "attn":
            region = jnp.asarray(emb_in[i, s + 1:e])
            ref = _mha_reference(region, params["implicit_tokens"], params)
            # bf16 MXU operands (intentional) -> slightly looser tolerance than pure f32.
            np.testing.assert_allclose(np.asarray(ref), aligned[i], rtol=2e-2, atol=2e-2)
            np.testing.assert_allclose(new_emb[i, :s], emb_in[i, :s], rtol=1e-6, atol=1e-6)
            np.testing.assert_allclose(new_emb[i, s:s + K_TOKENS], aligned[i],
                                       rtol=1e-6, atol=1e-6)
        elif mode == "none":
            np.testing.assert_allclose(new_emb[i, :SEQ], emb_in[i], rtol=1e-6, atol=1e-6)

    assert out["logits"].shape[-1] == VOCAB
    print("KERNEL_OK")
</pallas_src>

<mosaic_0001>
module attributes {stable_mosaic.version = 11 : i64} {
  func.func @_aligner_attn_kernel(%arg0: i32, %arg1: memref<2xi32, #tpu.memory_space<smem>>, %arg2: memref<1x16x128xf32, #tpu.memory_space<vmem>>, %arg3: memref<1x1x16xf32, #tpu.memory_space<vmem>>, %arg4: memref<32x128xbf16, #tpu.memory_space<vmem>>, %arg5: memref<128x128xbf16, #tpu.memory_space<vmem>>, %arg6: memref<128x128xbf16, #tpu.memory_space<vmem>>, %arg7: memref<128x128xbf16, #tpu.memory_space<vmem>>, %arg8: memref<1x128xf32, #tpu.memory_space<vmem>>, %arg9: memref<1x128xf32, #tpu.memory_space<vmem>>, %arg10: memref<1x128xf32, #tpu.memory_space<vmem>>, %arg11: memref<32x128xf32, #tpu.memory_space<vmem>>, %arg12: memref<4x32xbf16, #tpu.memory_space<vmem>>, %arg13: memref<1x4x128xf32, #tpu.memory_space<vmem>>) attributes {dimension_semantics = [#tpu.dimension_semantics<parallel>], iteration_bounds = array<i64: 2>, scalar_prefetch = 1 : i64, scratch_operands = 0 : i64, tpu.core_type = #tpu.core_type<tc>, window_params = [{transform_indices = @transform_0, window_bounds = array<i64: 1, 16, 128>}, {transform_indices = @transform_1, window_bounds = array<i64: 1, 1, 16>}, {pipeline_mode = #tpu.pipeline_mode<synchronous>, transform_indices = @transform_2, window_bounds = array<i64: 32, 128>}, {pipeline_mode = #tpu.pipeline_mode<synchronous>, transform_indices = @transform_3, window_bounds = array<i64: 128, 128>}, {pipeline_mode = #tpu.pipeline_mode<synchronous>, transform_indices = @transform_4, window_bounds = array<i64: 128, 128>}, {pipeline_mode = #tpu.pipeline_mode<synchronous>, transform_indices = @transform_5, window_bounds = array<i64: 128, 128>}, {pipeline_mode = #tpu.pipeline_mode<synchronous>, transform_indices = @transform_6, window_bounds = array<i64: 1, 128>}, {pipeline_mode = #tpu.pipeline_mode<synchronous>, transform_indices = @transform_7, window_bounds = array<i64: 1, 128>}, {pipeline_mode = #tpu.pipeline_mode<synchronous>, transform_indices = @transform_8, window_bounds = array<i64: 1, 128>}, {pipeline_mode = #tpu.pipeline_mode<synchronous>, transform_indices = @transform_9, window_bounds = array<i64: 32, 128>}, {pipeline_mode = #tpu.pipeline_mode<synchronous>, transform_indices = @transform_10, window_bounds = array<i64: 4, 32>}, {transform_indices = @transform_11, window_bounds = array<i64: 1, 4, 128>}]} {
    %0 = arith.index_cast %arg0 : i32 to index
    %1 = memref.load %arg1[%0] : memref<2xi32, #tpu.memory_space<smem>>
    %c0_i32 = arith.constant 0 : i32
    %2 = arith.cmpi ne, %1, %c0_i32 : i32
    %true = arith.constant true
    %3 = arith.xori %2, %true : i1
    %4 = arith.extui %3 : i1 to i32
    %c0_i32_0 = arith.constant 0 : i32
    %5 = arith.cmpi ne, %4, %c0_i32_0 : i32
    scf.if %5 {
      %cst = arith.constant 0.000000e+00 : f32
      %8 = vector.broadcast %cst : f32 to vector<4x128xf32>
      %c0 = arith.constant 0 : index
      %c0_2 = arith.constant 0 : index
      %c0_3 = arith.constant 0 : index
      %9 = vector.load %arg13[%c0, %c0_2, %c0_3] : memref<1x4x128xf32, #tpu.memory_space<vmem>>, vector<1x4x128xf32>
      %10 = vector.shape_cast %9 : vector<1x4x128xf32> to vector<4x128xf32>
      %11 = vector.shape_cast %8 : vector<4x128xf32> to vector<1x4x128xf32>
      tpu.vector_store %arg13[%c0, %c0_2, %c0_3], %11 {strides = array<i32>} : memref<1x4x128xf32, #tpu.memory_space<vmem>>, vector<1x4x128xf32>,
    } else {
    }
    %6 = arith.extui %2 : i1 to i32
    %c0_i32_1 = arith.constant 0 : i32
    %7 = arith.cmpi ne, %6, %c0_i32_1 : i32
    scf.if %7 {
      %c0 = arith.constant 0 : index
      %c0_2 = arith.constant 0 : index
      %c0_3 = arith.constant 0 : index
      %8 = vector.load %arg2[%c0, %c0_2, %c0_3] : memref<1x16x128xf32, #tpu.memory_space<vmem>>, vector<1x16x128xf32>
      %9 = vector.shape_cast %8 : vector<1x16x128xf32> to vector<16x128xf32>
      %10 = arith.truncf %9 : vector<16x128xf32> to vector<16x128xbf16>
      %c0_4 = arith.constant 0 : index
      %c0_5 = arith.constant 0 : index
      %11 = vector.load %arg5[%c0_4, %c0_5] : memref<128x128xbf16, #tpu.memory_space<vmem>>, vector<128x128xbf16>
      %cst = arith.constant dense<0.000000e+00> : vector<16x128xf32>
      %12 = tpu.matmul %10, %11, %cst {dimension_numbers = #tpu.dot_dimension_numbers<[1], [0], [0], [1], [0, 0, 1, 1], [], []>} : vector<16x128xbf16>, vector<128x128xbf16>, vector<16x128xf32> -> vector<16x128xf32>
      %c0_6 = arith.constant 0 : index
      %c0_7 = arith.constant 0 : index
      %13 = vector.load %arg8[%c0_6, %c0_7] : memref<1x128xf32, #tpu.memory_space<vmem>>, vector<1x128xf32>
      %14 = vector.broadcast %13 : vector<1x128xf32> to vector<16x128xf32>
      %15 = arith.addf %12, %14 : vector<16x128xf32>
      %c0_8 = arith.constant 0 : index
      %c0_9 = arith.constant 0 : index
      %16 = vector.load %arg6[%c0_8, %c0_9] : memref<128x128xbf16, #tpu.memory_space<vmem>>, vector<128x128xbf16>
      %cst_10 = arith.constant dense<0.000000e+00> : vector<16x128xf32>
      %17 = tpu.matmul %10, %16, %cst_10 {dimension_numbers = #tpu.dot_dimension_numbers<[1], [0], [0], [1], [0, 0, 1, 1], [], []>} : vector<16x128xbf16>, vector<128x128xbf16>, vector<16x128xf32> -> vector<16x128xf32>
      %c0_11 = arith.constant 0 : index
      %c0_12 = arith.constant 0 : index
      %18 = vector.load %arg9[%c0_11, %c0_12] : memref<1x128xf32, #tpu.memory_space<vmem>>, vector<1x128xf32>
      %19 = vector.broadcast %18 : vector<1x128xf32> to vector<16x128xf32>
      %20 = arith.addf %17, %19 : vector<16x128xf32>
      %c0_13 = arith.constant 0 : index
      %c0_14 = arith.constant 0 : index
      %21 = vector.load %arg4[%c0_13, %c0_14] : memref<32x128xbf16, #tpu.memory_space<vmem>>, vector<32x128xbf16>
      %22 = arith.truncf %15 : vector<16x128xf32> to vector<16x128xbf16>
      %cst_15 = arith.constant dense<0.000000e+00> : vector<32x16xf32>
      %23 = tpu.matmul %21, %22, %cst_15 {dimension_numbers = #tpu.dot_dimension_numbers<[1], [1], [0], [0], [0, 0, 1, 0], [], []>} : vector<32x128xbf16>, vector<16x128xbf16>, vector<32x16xf32> -> vector<32x16xf32>
      %c0_16 = arith.constant 0 : index
      %c0_17 = arith.constant 0 : index
      %c0_18 = arith.constant 0 : index
      %24 = vector.load %arg3[%c0_16, %c0_17, %c0_18] : memref<1x1x16xf32, #tpu.memory_space<vmem>>, vector<1x1x16xf32>
      %25 = vector.shape_cast %24 : vector<1x1x16xf32> to vector<1x16xf32>
      %26 = vector.broadcast %25 : vector<1x16xf32> to vector<32x16xf32>
      %27 = arith.addf %23, %26 : vector<32x16xf32>
      %cst_19 = arith.constant dense<0xFF800000> : vector<32xf32>
      %28 = vector.multi_reduction <maximumf>, %27, %cst_19 [1] : vector<32x16xf32> to vector<32xf32>
      %29 = vector.shape_cast %28 : vector<32xf32> to vector<32x1xf32>
      %30 = vector.broadcast %29 : vector<32x1xf32> to vector<32x16xf32>
      %31 = arith.subf %27, %30 : vector<32x16xf32>
      %32 = math.exp %31 : vector<32x16xf32>
      %cst_20 = arith.constant dense<0.000000e+00> : vector<32xf32>
      %33 = vector.multi_reduction <add>, %32, %cst_20 [1] : vector<32x16xf32> to vector<32xf32>
      %34 = vector.shape_cast %33 : vector<32xf32> to vector<32x1xf32>
      %35 = tpu.reciprocal %34 {approx = true} : vector<32x1xf32> -> vector<32x1xf32>
      %36 = vector.broadcast %35 : vector<32x1xf32> to vector<32x16xf32>
      %37 = arith.mulf %32, %36 : vector<32x16xf32>
      %38 = arith.truncf %37 : vector<32x16xf32> to vector<32x16xbf16>
      %39 = arith.truncf %20 : vector<16x128xf32> to vector<16x128xbf16>
      %cst_21 = arith.constant dense<0.000000e+00> : vector<32x128xf32>
      %40 = tpu.matmul %38, %39, %cst_21 {dimension_numbers = #tpu.dot_dimension_numbers<[1], [0], [0], [1], [0, 0, 1, 1], [], []>} : vector<32x16xbf16>, vector<16x128xbf16>, vector<32x128xf32> -> vector<32x128xf32>
      %c0_22 = arith.constant 0 : index
      %c0_23 = arith.constant 0 : index
      %41 = vector.load %arg11[%c0_22, %c0_23] : memref<32x128xf32, #tpu.memory_space<vmem>>, vector<32x128xf32>
      %42 = arith.mulf %40, %41 : vector<32x128xf32>
      %c0_24 = arith.constant 0 : index
      %c0_25 = arith.constant 0 : index
      %43 = vector.load %arg12[%c0_24, %c0_25] : memref<4x32xbf16, #tpu.memory_space<vmem>>, vector<4x32xbf16>
      %44 = arith.truncf %42 : vector<32x128xf32> to vector<32x128xbf16>
      %cst_26 = arith.constant dense<0.000000e+00> : vector<4x128xf32>
      %45 = tpu.matmul %43, %44, %cst_26 {dimension_numbers = #tpu.dot_dimension_numbers<[1], [0], [0], [1], [0, 0, 1, 1], [], []>} : vector<4x32xbf16>, vector<32x128xbf16>, vector<4x128xf32> -> vector<4x128xf32>
      %46 = arith.truncf %45 : vector<4x128xf32> to vector<4x128xbf16>
      %c0_27 = arith.constant 0 : index
      %c0_28 = arith.constant 0 : index
      %47 = vector.load %arg7[%c0_27, %c0_28] : memref<128x128xbf16, #tpu.memory_space<vmem>>, vector<128x128xbf16>
      %cst_29 = arith.constant dense<0.000000e+00> : vector<4x128xf32>
      %48 = tpu.matmul %46, %47, %cst_29 {dimension_numbers = #tpu.dot_dimension_numbers<[1], [0], [0], [1], [0, 0, 1, 1], [], []>} : vector<4x128xbf16>, vector<128x128xbf16>, vector<4x128xf32> -> vector<4x128xf32>
      %c0_30 = arith.constant 0 : index
      %c0_31 = arith.constant 0 : index
      %49 = vector.load %arg10[%c0_30, %c0_31] : memref<1x128xf32, #tpu.memory_space<vmem>>, vector<1x128xf32>
      %50 = vector.broadcast %49 : vector<1x128xf32> to vector<4x128xf32>
      %51 = arith.addf %48, %50 : vector<4x128xf32>
      %c0_32 = arith.constant 0 : index
      %c0_33 = arith.constant 0 : index
      %c0_34 = arith.constant 0 : index
      %52 = vector.load %arg13[%c0_32, %c0_33, %c0_34] : memref<1x4x128xf32, #tpu.memory_space<vmem>>, vector<1x4x128xf32>
      %53 = vector.shape_cast %52 : vector<1x4x128xf32> to vector<4x128xf32>
      %54 = vector.shape_cast %51 : vector<4x128xf32> to vector<1x4x128xf32>
      tpu.vector_store %arg13[%c0_32, %c0_33, %c0_34], %54 {strides = array<i32>} : memref<1x4x128xf32, #tpu.memory_space<vmem>>, vector<1x4x128xf32>,
    } else {
    }
    return
  }
  func.func @transform_0(%arg0: i32, %arg1: memref<2xi32, #tpu.memory_space<smem>>) -> (i32, i32, i32) {
    %c0_i32 = arith.constant 0 : i32
    %c0_i32_0 = arith.constant 0 : i32
    %c0_i32_1 = arith.constant 0 : i32
    return %arg0, %c0_i32, %c0_i32_0 : i32, i32, i32
  }
  func.func @transform_1(%arg0: i32, %arg1: memref<2xi32, #tpu.memory_space<smem>>) -> (i32, i32, i32) {
    %c0_i32 = arith.constant 0 : i32
    %c0_i32_0 = arith.constant 0 : i32
    %c0_i32_1 = arith.constant 0 : i32
    return %arg0, %c0_i32, %c0_i32_0 : i32, i32, i32
  }
  func.func @transform_2(%arg0: i32, %arg1: memref<2xi32, #tpu.memory_space<smem>>) -> (i32, i32) {
    %c0_i32 = arith.constant 0 : i32
    %c0_i32_0 = arith.constant 0 : i32
    %c0_i32_1 = arith.constant 0 : i32
    return %c0_i32, %c0_i32_0 : i32, i32
  }
  func.func @transform_3(%arg0: i32, %arg1: memref<2xi32, #tpu.memory_space<smem>>) -> (i32, i32) {
    %c0_i32 = arith.constant 0 : i32
    %c0_i32_0 = arith.constant 0 : i32
    %c0_i32_1 = arith.constant 0 : i32
    return %c0_i32, %c0_i32_0 : i32, i32
  }
  func.func @transform_4(%arg0: i32, %arg1: memref<2xi32, #tpu.memory_space<smem>>) -> (i32, i32) {
    %c0_i32 = arith.constant 0 : i32
    %c0_i32_0 = arith.constant 0 : i32
    %c0_i32_1 = arith.constant 0 : i32
    return %c0_i32, %c0_i32_0 : i32, i32
  }
  func.func @transform_5(%arg0: i32, %arg1: memref<2xi32, #tpu.memory_space<smem>>) -> (i32, i32) {
    %c0_i32 = arith.constant 0 : i32
    %c0_i32_0 = arith.constant 0 : i32
    %c0_i32_1 = arith.constant 0 : i32
    return %c0_i32, %c0_i32_0 : i32, i32
  }
  func.func @transform_6(%arg0: i32, %arg1: memref<2xi32, #tpu.memory_space<smem>>) -> (i32, i32) {
    %c0_i32 = arith.constant 0 : i32
    %c0_i32_0 = arith.constant 0 : i32
    %c0_i32_1 = arith.constant 0 : i32
    return %c0_i32, %c0_i32_0 : i32, i32
  }
  func.func @transform_7(%arg0: i32, %arg1: memref<2xi32, #tpu.memory_space<smem>>) -> (i32, i32) {
    %c0_i32 = arith.constant 0 : i32
    %c0_i32_0 = arith.constant 0 : i32
    %c0_i32_1 = arith.constant 0 : i32
    return %c0_i32, %c0_i32_0 : i32, i32
  }
  func.func @transform_8(%arg0: i32, %arg1: memref<2xi32, #tpu.memory_space<smem>>) -> (i32, i32) {
    %c0_i32 = arith.constant 0 : i32
    %c0_i32_0 = arith.constant 0 : i32
    %c0_i32_1 = arith.constant 0 : i32
    return %c0_i32, %c0_i32_0 : i32, i32
  }
  func.func @transform_9(%arg0: i32, %arg1: memref<2xi32, #tpu.memory_space<smem>>) -> (i32, i32) {
    %c0_i32 = arith.constant 0 : i32
    %c0_i32_0 = arith.constant 0 : i32
    %c0_i32_1 = arith.constant 0 : i32
    return %c0_i32, %c0_i32_0 : i32, i32
  }
  func.func @transform_10(%arg0: i32, %arg1: memref<2xi32, #tpu.memory_space<smem>>) -> (i32, i32) {
    %c0_i32 = arith.constant 0 : i32
    %c0_i32_0 = arith.constant 0 : i32
    %c0_i32_1 = arith.constant 0 : i32
    return %c0_i32, %c0_i32_0 : i32, i32
  }
  func.func @transform_11(%arg0: i32, %arg1: memref<2xi32, #tpu.memory_space<smem>>) -> (i32, i32, i32) {
    %c0_i32 = arith.constant 0 : i32
    %c0_i32_0 = arith.constant 0 : i32
    %c0_i32_1 = arith.constant 0 : i32
    return %arg0, %c0_i32, %c0_i32_0 : i32, i32, i32
  }
}

</mosaic_0001>

<llo_original>
// kernel: tpu_custom_call.1
$region0: #{tpu_custom_call.1}
  #allocation0 [shape = 'u32[]', space=smem, size = 0x4, offset = 0x4, fixed_abs, tag = 'smem constant byte address 0x4 - core index']
  #allocation1 [shape = 'u32[144,128]{1,0:T(1,128)}', space=vmem, size = 0x12000, scoped, tag = 'internal scratch']
  #allocation2 [shape = 's32[1]{0}', space=sflag, size = 0x4, scoped, tag = 'scoped memory for tpu_custom_call.1']
  #allocation3 [shape = 'u8[512]{0}', space=smem, size = 0x200, scoped, tag = 'prefetched SMEM operand 0']
  %s0 = inlined_call_operand.hbm [shape: s32[2], index: 0, kind: input, shape index: {}]
  %s1 = inlined_call_operand.hbm [shape: f32[2,16,128], index: 1, kind: input, shape index: {}]
  %s2 = inlined_call_operand.vmem [shape: f32[2,1,16], index: 2, kind: input, shape index: {}]
  %s3 = inlined_call_operand.hbm [shape: bf16[32,128], index: 3, kind: input, shape index: {}]
  %s4 = inlined_call_operand.hbm [shape: bf16[128,128], index: 4, kind: input, shape index: {}]
  %s5 = inlined_call_operand.hbm [shape: bf16[128,128], index: 5, kind: input, shape index: {}]
  %s6 = inlined_call_operand.hbm [shape: bf16[128,128], index: 6, kind: input, shape index: {}]
  %s7 = inlined_call_operand.vmem [shape: f32[1,128], index: 7, kind: input, shape index: {}]
  %s8 = inlined_call_operand.vmem [shape: f32[1,128], index: 8, kind: input, shape index: {}]
  %s9 = inlined_call_operand.vmem [shape: f32[1,128], index: 9, kind: input, shape index: {}]
  %s10 = inlined_call_operand.hbm [shape: f32[32,128], index: 10, kind: input, shape index: {}]
  %s11 = inlined_call_operand.vmem [shape: bf16[4,32], index: 11, kind: input, shape index: {}]
  %s12 = inlined_call_operand.hbm [shape: f32[2,4,128], index: 12, kind: output, shape index: {}]
  %s13 = sld [smem:[#allocation0]]
  $region109: #{tpu_custom_call.1} parent=0
    _
  %s15 = ssub.s32 1, %s13
  %s16 = scalar_select 0, %s15, %s13
  %18 = dma.hbm_to_smem %s0, 16, [#allocation3], [#allocation2]
  %19 = dma.done [#allocation2], 16
  %20 = sfence
  $region1: #{tpu_custom_call.1} parent=0
    #allocation4 [shape = 'u8[16384]{0}', space=vmem, size = 0x4000, scoped, tag = 'input window, operand 1']
    #allocation5 [shape = 's32[2]{0}', space=sflag, size = 0x8, scoped, tag = 'scoped memory for tpu_custom_call.1']
    #allocation6 [shape = 's32[2]{0}', space=sflag, size = 0x8, scoped, tag = 'scoped memory for tpu_custom_call.1']
    #allocation7 [shape = 'u8[8192]{0}', space=vmem, size = 0x2000, scoped, tag = 'input window, operand 3, single buffered']
    #allocation8 [shape = 's32[1]{0}', space=sflag, size = 0x4, scoped, tag = 'scoped memory for tpu_custom_call.1']
    #allocation9 [shape = 'u8[32768]{0}', space=vmem, size = 0x8000, scoped, tag = 'input window, operand 4, single buffered']
    #allocation10 [shape = 'u8[32768]{0}', space=vmem, size = 0x8000, scoped, tag = 'input window, operand 5, single buffered']
    #allocation11 [shape = 's32[1]{0}', space=sflag, size = 0x4, scoped, tag = 'scoped memory for tpu_custom_call.1']
    #allocation12 [shape = 'u8[32768]{0}', space=vmem, size = 0x8000, scoped, tag = 'input window, operand 6, single buffered']
    #allocation13 [shape = 'u8[16384]{0}', space=vmem, size = 0x4000, scoped, tag = 'input window, operand 10, single buffered']
    #allocation14 [shape = 's32[1]{0}', space=sflag, size = 0x4, scoped, tag = 'scoped memory for tpu_custom_call.1']
    #allocation15 [shape = 'u8[4096]{0}', space=vmem, size = 0x1000, scoped, tag = 'output window, operand 0']
    %21 = vsyncpa [#allocation5], 0
    %s22 = scalar_lea.sflag [#allocation5], 1
    %23 = vsyncpa %s22, 0
    %24 = vsyncpa [#allocation8], 0
    %25 = vsyncpa [#allocation11], 0
    %26 = vsyncpa [#allocation14], 0
    %27 = vsyncpa [#allocation6], 0
    %s28 = scalar_lea.sflag [#allocation6], 1
    %29 = vsyncpa %s28, 0
    loop: start=0, step=1, limit=4
    $region2: #{tpu_custom_call.1} parent=1 // loop_pre_header
      _
    $region3: #{tpu_custom_call.1} parent=1 // loop_header
      %s31 = sphi 0, %s35
      %p32 = scmp.ge.s32.totalorder %s31, 4
      %s41 = sphi 0, %s43
      %s44 = sphi 0, %s41
      %s45 = sphi 0, %s44
      %s61 = sphi 0, %s45
      %s67 = sphi 0, %s69
      %s70 = sphi 0, %s67
      %s71 = sphi 0, %s70
      %s87 = sphi 0, %s71
      %s91 = sphi 0, %s91
      %s93 = sphi 0, %s91
      %s94 = sphi 0, %s93
      %s108 = sphi 0, %s94
      %s112 = sphi 0, %s112
      %s114 = sphi 0, %s112
      %s115 = sphi 0, %s114
      %s129 = sphi 0, %s115
      %s133 = sphi 0, %s133
      %s135 = sphi 0, %s133
      %s136 = sphi 0, %s135
      %s150 = sphi 0, %s136
      %s154 = sphi 0, %s154
      %s156 = sphi 0, %s154
      %s157 = sphi 0, %s156
      %s171 = sphi 0, %s157
      %s175 = sphi 0, %s175
      %s177 = sphi 0, %s175
      %s178 = sphi 0, %s177
      %s192 = sphi 0, %s178
      %s196 = sphi 0, %s196
      %s198 = sphi 0, %s196
      %s199 = sphi 0, %s198
      %s213 = sphi 0, %s199
      %s217 = sphi 0, %s217
      %s219 = sphi 0, %s217
      %s220 = sphi 0, %s219
      %s234 = sphi 0, %s220
      %s238 = sphi 0, %s238
      %s240 = sphi 0, %s238
      %s241 = sphi 0, %s240
      %s255 = sphi 0, %s241
      %s259 = sphi 0, %s259
      %s261 = sphi 0, %s259
      %s262 = sphi 0, %s261
      %s276 = sphi 0, %s262
      %s282 = sphi 0, %s284
      %s285 = sphi 0, %s282
      %s286 = sphi 0, %s285
      %s302 = sphi 0, %s286
    $region4: #{tpu_custom_call.1} parent=1 // loop_header_branch
      %34 = sbr.rel (%p32) target = $region8
    $region5: #{tpu_custom_call.1} parent=1 // loop_body
      %s36 = ssub.s32 %s31, 1
      %s37 = ssub.s32 %s31, 2
      %s38 = sadd.s32 %s31, 1
      %s39 = ssub.s32 %s31, %s38
      %p40 = scmp.eq.s32.totalorder %s39, 0
      %s42 = sadd.s32 %s41, 1
      %s43 = scalar_select %p40, %s41, %s42
      %p46 = pneg %p40
      %p47 = scmp.eq.s32.totalorder %s31, 1
      %p48 = por %p46, %p47
      %p49 = scmp.ne.s32.totalorder %s41, %s44
      %p50 = scmp.eq.s32.totalorder %s31, 0
      %p51 = por %p49, %p50
      %p52 = scmp.ne.s32.totalorder %s41, %s44
      %p53 = scmp.eq.s32.totalorder %s36, 1
      %p54 = por %p52, %p53
      %p55 = scmp.ne.s32.totalorder %s44, %s45
      %p56 = scmp.eq.s32.totalorder %s36, 0
      %p57 = por %p55, %p56
      %p58 = scmp.ne.s32.totalorder %s44, %s45
      %p59 = scmp.eq.s32.totalorder %s37, 1
      %p60 = por %p58, %p59
      %p62 = scmp.ne.s32.totalorder %s45, %s61
      %p63 = scmp.eq.s32.totalorder %s37, 0
      %p64 = por %p62, %p63
      %s65 = ssub.s32 %s31, %s38
      %p66 = scmp.eq.s32.totalorder %s65, 0
      %s68 = sadd.s32 %s67, 1
      %s69 = scalar_select %p66, %s67, %s68
      %p72 = pneg %p66
      %p73 = scmp.eq.s32.totalorder %s31, 1
      %p74 = por %p72, %p73
      %p75 = scmp.ne.s32.totalorder %s67, %s70
      %p76 = scmp.eq.s32.totalorder %s31, 0
      %p77 = por %p75, %p76
      %p78 = scmp.ne.s32.totalorder %s67, %s70
      %p79 = scmp.eq.s32.totalorder %s36, 1
      %p80 = por %p78, %p79
      %p81 = scmp.ne.s32.totalorder %s70, %s71
      %p82 = scmp.eq.s32.totalorder %s36, 0
      %p83 = por %p81, %p82
      %p84 = scmp.ne.s32.totalorder %s70, %s71
      %p85 = scmp.eq.s32.totalorder %s37, 1
      %p86 = por %p84, %p85
      %p88 = scmp.ne.s32.totalorder %s71, %s87
      %p89 = scmp.eq.s32.totalorder %s37, 0
      %p90 = por %p88, %p89
      %s92 = sadd.s32 %s91, 1
      %p95 = scmp.eq.s32.totalorder %s31, 1
      %p96 = scmp.ne.s32.totalorder %s91, %s93
      %p97 = scmp.eq.s32.totalorder %s31, 0
      %p98 = por %p96, %p97
      %p99 = scmp.ne.s32.totalorder %s91, %s93
      %p100 = scmp.eq.s32.totalorder %s36, 1
      %p101 = por %p99, %p100
      %p102 = scmp.ne.s32.totalorder %s93, %s94
      %p103 = scmp.eq.s32.totalorder %s36, 0
      %p104 = por %p102, %p103
      %p105 = scmp.ne.s32.totalorder %s93, %s94
      %p106 = scmp.eq.s32.totalorder %s37, 1
      %p107 = por %p105, %p106
      %p109 = scmp.ne.s32.totalorder %s94, %s108
      %p110 = scmp.eq.s32.totalorder %s37, 0
      %p111 = por %p109, %p110
      %s113 = sadd.s32 %s112, 1
      %p116 = scmp.eq.s32.totalorder %s31, 1
      %p117 = scmp.ne.s32.totalorder %s112, %s114
      %p118 = scmp.eq.s32.totalorder %s31, 0
      %p119 = por %p117, %p118
      %p120 = scmp.ne.s32.totalorder %s112, %s114
      %p121 = scmp.eq.s32.totalorder %s36, 1
      %p122 = por %p120, %p121
      %p123 = scmp.ne.s32.totalorder %s114, %s115
      %p124 = scmp.eq.s32.totalorder %s36, 0
      %p125 = por %p123, %p124
      %p126 = scmp.ne.s32.totalorder %s114, %s115
      %p127 = scmp.eq.s32.totalorder %s37, 1
      %p128 = por %p126, %p127
      %p130 = scmp.ne.s32.totalorder %s115, %s129
      %p131 = scmp.eq.s32.totalorder %s37, 0
      %p132 = por %p130, %p131
      %s134 = sadd.s32 %s133, 1
      %p137 = scmp.eq.s32.totalorder %s31, 1
      %p138 = scmp.ne.s32.totalorder %s133, %s135
      %p139 = scmp.eq.s32.totalorder %s31, 0
      %p140 = por %p138, %p139
      %p141 = scmp.ne.s32.totalorder %s133, %s135
      %p142 = scmp.eq.s32.totalorder %s36, 1
      %p143 = por %p141, %p142
      %p144 = scmp.ne.s32.totalorder %s135, %s136
      %p145 = scmp.eq.s32.totalorder %s36, 0
      %p146 = por %p144, %p145
      %p147 = scmp.ne.s32.totalorder %s135, %s136
      %p148 = scmp.eq.s32.totalorder %s37, 1
      %p149 = por %p147, %p148
      %p151 = scmp.ne.s32.totalorder %s136, %s150
      %p152 = scmp.eq.s32.totalorder %s37, 0
      %p153 = por %p151, %p152
      %s155 = sadd.s32 %s154, 1
      %p158 = scmp.eq.s32.totalorder %s31, 1
      %p159 = scmp.ne.s32.totalorder %s154, %s156
      %p160 = scmp.eq.s32.totalorder %s31, 0
      %p161 = por %p159, %p160
      %p162 = scmp.ne.s32.totalorder %s154, %s156
      %p163 = scmp.eq.s32.totalorder %s36, 1
      %p164 = por %p162, %p163
      %p165 = scmp.ne.s32.totalorder %s156, %s157
      %p166 = scmp.eq.s32.totalorder %s36, 0
      %p167 = por %p165, %p166
      %p168 = scmp.ne.s32.totalorder %s156, %s157
      %p169 = scmp.eq.s32.totalorder %s37, 1
      %p170 = por %p168, %p169
      %p172 = scmp.ne.s32.totalorder %s157, %s171
      %p173 = scmp.eq.s32.totalorder %s37, 0
      %p174 = por %p172, %p173
      %s176 = sadd.s32 %s175, 1
      %p179 = scmp.eq.s32.totalorder %s31, 1
      %p180 = scmp.ne.s32.totalorder %s175, %s177
      %p181 = scmp.eq.s32.totalorder %s31, 0
      %p182 = por %p180, %p181
      %p183 = scmp.ne.s32.totalorder %s175, %s177
      %p184 = scmp.eq.s32.totalorder %s36, 1
      %p185 = por %p183, %p184
      %p186 = scmp.ne.s32.totalorder %s177, %s178
      %p187 = scmp.eq.s32.totalorder %s36, 0
      %p188 = por %p186, %p187
      %p189 = scmp.ne.s32.totalorder %s177, %s178
      %p190 = scmp.eq.s32.totalorder %s37, 1
      %p191 = por %p189, %p190
      %p193 = scmp.ne.s32.totalorder %s178, %s192
      %p194 = scmp.eq.s32.totalorder %s37, 0
      %p195 = por %p193, %p194
      %s197 = sadd.s32 %s196, 1
      %p200 = scmp.eq.s32.totalorder %s31, 1
      %p201 = scmp.ne.s32.totalorder %s196, %s198
      %p202 = scmp.eq.s32.totalorder %s31, 0
      %p203 = por %p201, %p202
      %p204 = scmp.ne.s32.totalorder %s196, %s198
      %p205 = scmp.eq.s32.totalorder %s36, 1
      %p206 = por %p204, %p205
      %p207 = scmp.ne.s32.totalorder %s198, %s199
      %p208 = scmp.eq.s32.totalorder %s36, 0
      %p209 = por %p207, %p208
      %p210 = scmp.ne.s32.totalorder %s198, %s199
      %p211 = scmp.eq.s32.totalorder %s37, 1
      %p212 = por %p210, %p211
      %p214 = scmp.ne.s32.totalorder %s199, %s213
      %p215 = scmp.eq.s32.totalorder %s37, 0
      %p216 = por %p214, %p215
      %s218 = sadd.s32 %s217, 1
      %p221 = scmp.eq.s32.totalorder %s31, 1
      %p222 = scmp.ne.s32.totalorder %s217, %s219
      %p223 = scmp.eq.s32.totalorder %s31, 0
      %p224 = por %p222, %p223
      %p225 = scmp.ne.s32.totalorder %s217, %s219
      %p226 = scmp.eq.s32.totalorder %s36, 1
      %p227 = por %p225, %p226
      %p228 = scmp.ne.s32.totalorder %s219, %s220
      %p229 = scmp.eq.s32.totalorder %s36, 0
      %p230 = por %p228, %p229
      %p231 = scmp.ne.s32.totalorder %s219, %s220
      %p232 = scmp.eq.s32.totalorder %s37, 1
      %p233 = por %p231, %p232
      %p235 = scmp.ne.s32.totalorder %s220, %s234
      %p236 = scmp.eq.s32.totalorder %s37, 0
      %p237 = por %p235, %p236
      %s239 = sadd.s32 %s238, 1
      %p242 = scmp.eq.s32.totalorder %s31, 1
      %p243 = scmp.ne.s32.totalorder %s238, %s240
      %p244 = scmp.eq.s32.totalorder %s31, 0
      %p245 = por %p243, %p244
      %p246 = scmp.ne.s32.totalorder %s238, %s240
      %p247 = scmp.eq.s32.totalorder %s36, 1
      %p248 = por %p246, %p247
      %p249 = scmp.ne.s32.totalorder %s240, %s241
      %p250 = scmp.eq.s32.totalorder %s36, 0
      %p251 = por %p249, %p250
      %p252 = scmp.ne.s32.totalorder %s240, %s241
      %p253 = scmp.eq.s32.totalorder %s37, 1
      %p254 = por %p252, %p253
      %p256 = scmp.ne.s32.totalorder %s241, %s255
      %p257 = scmp.eq.s32.totalorder %s37, 0
      %p258 = por %p256, %p257
      %s260 = sadd.s32 %s259, 1
      %p263 = scmp.eq.s32.totalorder %s31, 1
      %p264 = scmp.ne.s32.totalorder %s259, %s261
      %p265 = scmp.eq.s32.totalorder %s31, 0
      %p266 = por %p264, %p265
      %p267 = scmp.ne.s32.totalorder %s259, %s261
      %p268 = scmp.eq.s32.totalorder %s36, 1
      %p269 = por %p267, %p268
      %p270 = scmp.ne.s32.totalorder %s261, %s262
      %p271 = scmp.eq.s32.totalorder %s36, 0
      %p272 = por %p270, %p271
      %p273 = scmp.ne.s32.totalorder %s261, %s262
      %p274 = scmp.eq.s32.totalorder %s37, 1
      %p275 = por %p273, %p274
      %p277 = scmp.ne.s32.totalorder %s262, %s276
      %p278 = scmp.eq.s32.totalorder %s37, 0
      %p279 = por %p277, %p278
      %s280 = ssub.s32 %s31, %s38
      %p281 = scmp.eq.s32.totalorder %s280, 0
      %s283 = sadd.s32 %s282, 1
      %s284 = scalar_select %p281, %s282, %s283
      %p287 = pneg %p281
      %p288 = scmp.eq.s32.totalorder %s31, 1
      %p289 = por %p287, %p288
      %p290 = scmp.ne.s32.totalorder %s282, %s285
      %p291 = scmp.eq.s32.totalorder %s31, 0
      %p292 = por %p290, %p291
      %p293 = scmp.ne.s32.totalorder %s282, %s285
      %p294 = scmp.eq.s32.totalorder %s36, 1
      %p295 = por %p293, %p294
      %p296 = scmp.ne.s32.totalorder %s285, %s286
      %p297 = scmp.eq.s32.totalorder %s36, 0
      %p298 = por %p296, %p297
      %p299 = scmp.ne.s32.totalorder %s285, %s286
      %p300 = scmp.eq.s32.totalorder %s37, 1
      %p301 = por %p299, %p300
      %p303 = scmp.ne.s32.totalorder %s286, %s302
      %p304 = scmp.eq.s32.totalorder %s37, 0
      %p305 = por %p303, %p304
      %p306 = scmp.le.s32.totalorder 1, %s31
      %p307 = scmp.lt.s32.totalorder %s31, 3
      %p308 = pnand %p306, %p307
      %p309 = pneg %p308
      // Predicated region
      $region9: #{tpu_custom_call.1} parent=5 // pred_check
        _
      $region10: #{tpu_custom_call.1} parent=5 // pred_check_branch
        %311 = sbr.rel (%p308) target = $region12
      $region11: #{tpu_custom_call.1} parent=5 // pred_region
        %s312 = ssub.s32 %s31, 1
        // Predicated region
        $region13: #{tpu_custom_call.1} parent=11 // pred_check
          %p313 = pneg %p104
        $region14: #{tpu_custom_call.1} parent=11 // pred_check_branch
          %315 = sbr.rel (%p313) target = $region16
        $region15: #{tpu_custom_call.1} parent=11 // pred_region
          %s317 = ssub.s32 256, 256
          %318 = vsyncadd [#allocation8], %s317
          %s319 = sshll.u32 [#allocation7], 4
          %s320 = int_to_ptr.vmem [resolvable:$true] %s319
          %325 = dma.hbm_to_vmem [thread:$0]  %s3, 256, %s320, [#allocation8], 64, 64, 4
        $region16: #{tpu_custom_call.1} parent=11 // pred_fallthru
          _
        // Predicated region
        $region17: #{tpu_custom_call.1} parent=11 // pred_check
          %p326 = pneg %p125
        $region18: #{tpu_custom_call.1} parent=11 // pred_check_branch
          %328 = sbr.rel (%p326) target = $region20
        $region19: #{tpu_custom_call.1} parent=11 // pred_region
          %s330 = ssub.s32 1024, 1024
          %331 = vsyncadd [#allocation8], %s330
          %s332 = sshll.u32 [#allocation9], 4
          %s333 = int_to_ptr.vmem [resolvable:$true] %s332
          %338 = dma.hbm_to_vmem [thread:$0]  %s4, 1024, %s333, [#allocation8], 64, 64, 4
        $region20: #{tpu_custom_call.1} parent=11 // pred_fallthru
          _
        // Predicated region
        $region21: #{tpu_custom_call.1} parent=11 // pred_check
          %p339 = pneg %p146
        $region22: #{tpu_custom_call.1} parent=11 // pred_check_branch
          %341 = sbr.rel (%p339) target = $region24
        $region23: #{tpu_custom_call.1} parent=11 // pred_region
          %s343 = ssub.s32 1024, 1024
          %344 = vsyncadd [#allocation11], %s343
          %s345 = sshll.u32 [#allocation10], 4
          %s346 = int_to_ptr.vmem [resolvable:$true] %s345
          %351 = dma.hbm_to_vmem [thread:$0]  %s5, 1024, %s346, [#allocation11], 64, 64, 4
        $region24: #{tpu_custom_call.1} parent=11 // pred_fallthru
          _
        // Predicated region
        $region25: #{tpu_custom_call.1} parent=11 // pred_check
          %p352 = pneg %p167
        $region26: #{tpu_custom_call.1} parent=11 // pred_check_branch
          %354 = sbr.rel (%p352) target = $region28
        $region27: #{tpu_custom_call.1} parent=11 // pred_region
          %s356 = ssub.s32 1024, 1024
          %357 = vsyncadd [#allocation11], %s356
          %s358 = sshll.u32 [#allocation12], 4
          %s359 = int_to_ptr.vmem [resolvable:$true] %s358
          %364 = dma.hbm_to_vmem [thread:$0]  %s6, 1024, %s359, [#allocation11], 64, 64, 4
        $region28: #{tpu_custom_call.1} parent=11 // pred_fallthru
          _
        // Predicated region
        $region29: #{tpu_custom_call.1} parent=11 // pred_check
          %p365 = pneg %p188
        $region30: #{tpu_custom_call.1} parent=11 // pred_check_branch
          %367 = sbr.rel (%p365) target = $region32
        $region31: #{tpu_custom_call.1} parent=11 // pred_region
          _
        $region32: #{tpu_custom_call.1} parent=11 // pred_fallthru
          _
        // Predicated region
        $region33: #{tpu_custom_call.1} parent=11 // pred_check
          %p368 = pneg %p209
        $region34: #{tpu_custom_call.1} parent=11 // pred_check_branch
          %370 = sbr.rel (%p368) target = $region36
        $region35: #{tpu_custom_call.1} parent=11 // pred_region
          _
        $region36: #{tpu_custom_call.1} parent=11 // pred_fallthru
          _
        // Predicated region
        $region37: #{tpu_custom_call.1} parent=11 // pred_check
          %p371 = pneg %p230
        $region38: #{tpu_custom_call.1} parent=11 // pred_check_branch
          %373 = sbr.rel (%p371) target = $region40
        $region39: #{tpu_custom_call.1} parent=11 // pred_region
          _
        $region40: #{tpu_custom_call.1} parent=11 // pred_fallthru
          _
        // Predicated region
        $region41: #{tpu_custom_call.1} parent=11 // pred_check
          %p374 = pneg %p251
        $region42: #{tpu_custom_call.1} parent=11 // pred_check_branch
          %376 = sbr.rel (%p374) target = $region44
        $region43: #{tpu_custom_call.1} parent=11 // pred_region
          %s378 = ssub.s32 512, 512
          %379 = vsyncadd [#allocation14], %s378
          %s380 = sshll.u32 [#allocation13], 4
          %s381 = int_to_ptr.vmem [resolvable:$true] %s380
          %386 = dma.hbm_to_vmem [thread:$0]  %s10, 512, %s381, [#allocation14], 128, 128, 8
        $region44: #{tpu_custom_call.1} parent=11 // pred_fallthru
          _
        // Predicated region
        $region45: #{tpu_custom_call.1} parent=11 // pred_check
          %p387 = pneg %p272
        $region46: #{tpu_custom_call.1} parent=11 // pred_check_branch
          %389 = sbr.rel (%p387) target = $region48
        $region47: #{tpu_custom_call.1} parent=11 // pred_region
          _
        $region48: #{tpu_custom_call.1} parent=11 // pred_fallthru
          _
      $region12: #{tpu_custom_call.1} parent=5 // pred_fallthru
        _
      %p390 = scmp.lt.s32.totalorder %s31, 2
      // Predicated region
      $region49: #{tpu_custom_call.1} parent=5 // pred_check
        %p391 = pneg %p390
      $region50: #{tpu_custom_call.1} parent=5 // pred_check_branch
        %393 = sbr.rel (%p391) target = $region52
      $region51: #{tpu_custom_call.1} parent=5 // pred_region
        // Predicated region
        $region53: #{tpu_custom_call.1} parent=51 // pred_check
          %p394 = pneg %p51
        $region54: #{tpu_custom_call.1} parent=51 // pred_check_branch
          %396 = sbr.rel (%p394) target = $region56
        $region55: #{tpu_custom_call.1} parent=51 // pred_region
          %s397 = sand.u32 %s41, 1
          %s398 = scalar_lea.sflag [#allocation5], %s397
          %s399 = sand.u32 %s41, 1
          %s400 = smul.addr %s399, 16
          %s401 = scalar_lea.vmem [#allocation4], %s400
          %s403 = ssub.s32 256, 256
          %404 = vsyncadd %s398, %s403
          %s405 = smul.addr %s31, 2
          %s406 = smul.addr %s405, 128
          %s407 = scalar_lea.hbm %s1, %s406
          %s408 = sshll.u32 %s401, 4
          %s409 = int_to_ptr.vmem [resolvable:$true] %s408
          %414 = dma.hbm_to_vmem [thread:$0]  %s407, 256, %s409, %s398, 128, 128, 8
        $region56: #{tpu_custom_call.1} parent=51 // pred_fallthru
          _
        // Predicated region
        $region57: #{tpu_custom_call.1} parent=51 // pred_check
          %p415 = pneg %p77
        $region58: #{tpu_custom_call.1} parent=51 // pred_check_branch
          %417 = sbr.rel (%p415) target = $region60
        $region59: #{tpu_custom_call.1} parent=51 // pred_region
          %p418 = scmp.lt.s32.totalorder %s31, 1
          %s419 = scalar_select %p418, %s31, 1
          %s420 = scalar_lea.vmem %s2, %s419
        $region60: #{tpu_custom_call.1} parent=51 // pred_fallthru
          _
      $region52: #{tpu_custom_call.1} parent=5 // pred_fallthru
        _
      %p421 = scmp.le.s32.totalorder 1, %s31
      %p422 = scmp.lt.s32.totalorder %s31, 3
      %p423 = pnand %p421, %p422
      %p424 = pneg %p423
      // Predicated region
      $region61: #{tpu_custom_call.1} parent=5 // pred_check
        _
      $region62: #{tpu_custom_call.1} parent=5 // pred_check_branch
        %426 = sbr.rel (%p423) target = $region64
      $region63: #{tpu_custom_call.1} parent=5 // pred_region
        %s427 = ssub.s32 %s31, 1
        %s428 = sand.u32 %s44, 1
        %s429 = scalar_lea.sflag [#allocation5], %s428
        %s430 = sand.u32 %s44, 1
        %s431 = smul.addr %s430, 16
        %s432 = scalar_lea.vmem [#allocation4], %s431
        // Predicated region
        $region65: #{tpu_custom_call.1} parent=63 // pred_check
          %p433 = pneg %p57
        $region66: #{tpu_custom_call.1} parent=63 // pred_check_branch
          %435 = sbr.rel (%p433) target = $region68
        $region67: #{tpu_custom_call.1} parent=63 // pred_region
          %436 = dma.done %s429, 256
        $region68: #{tpu_custom_call.1} parent=63 // pred_fallthru
          _
        // Predicated region
        $region69: #{tpu_custom_call.1} parent=63 // pred_check
          %p437 = pneg %p104
        $region70: #{tpu_custom_call.1} parent=63 // pred_check_branch
          %439 = sbr.rel (%p437) target = $region72
        $region71: #{tpu_custom_call.1} parent=63 // pred_region
          %440 = dma.done [#allocation8], 256
        $region72: #{tpu_custom_call.1} parent=63 // pred_fallthru
          _
        // Predicated region
        $region73: #{tpu_custom_call.1} parent=63 // pred_check
          %p441 = pneg %p125
        $region74: #{tpu_custom_call.1} parent=63 // pred_check_branch
          %443 = sbr.rel (%p441) target = $region76
        $region75: #{tpu_custom_call.1} parent=63 // pred_region
          %444 = dma.done [#allocation8], 1024
        $region76: #{tpu_custom_call.1} parent=63 // pred_fallthru
          _
        // Predicated region
        $region77: #{tpu_custom_call.1} parent=63 // pred_check
          %p445 = pneg %p146
        $region78: #{tpu_custom_call.1} parent=63 // pred_check_branch
          %447 = sbr.rel (%p445) target = $region80
        $region79: #{tpu_custom_call.1} parent=63 // pred_region
          %448 = dma.done [#allocation11], 1024
        $region80: #{tpu_custom_call.1} parent=63 // pred_fallthru
          _
        // Predicated region
        $region81: #{tpu_custom_call.1} parent=63 // pred_check
          %p449 = pneg %p167
        $region82: #{tpu_custom_call.1} parent=63 // pred_check_branch
          %451 = sbr.rel (%p449) target = $region84
        $region83: #{tpu_custom_call.1} parent=63 // pred_region
          %452 = dma.done [#allocation11], 1024
        $region84: #{tpu_custom_call.1} parent=63 // pred_fallthru
          _
        // Predicated region
        $region85: #{tpu_custom_call.1} parent=63 // pred_check
          %p453 = pneg %p251
        $region86: #{tpu_custom_call.1} parent=63 // pred_check_branch
          %455 = sbr.rel (%p453) target = $region88
        $region87: #{tpu_custom_call.1} parent=63 // pred_region
          %456 = dma.done [#allocation14], 512
        $region88: #{tpu_custom_call.1} parent=63 // pred_fallthru
          _
        %s457 = sand.u32 %s44, 1
        %s458 = scalar_lea.sflag [#allocation5], %s457
        %s459 = sand.u32 %s44, 1
        %s460 = smul.addr %s459, 16
        %s461 = scalar_lea.vmem [#allocation4], %s460
        %p462 = pneg %p57
        %p463 = pneg %p54
        %p464 = scmp.lt.s32.totalorder %s36, 1
        %s465 = scalar_select %p464, %s36, 1
        %s466 = scalar_lea.vmem %s2, %s465
        %p467 = pneg %p83
        %p468 = pneg %p80
        %p469 = pneg %p104
        %p470 = pneg %p101
        %p471 = pneg %p125
        %p472 = pneg %p122
        %p473 = pneg %p146
        %p474 = pneg %p143
        %p475 = pneg %p167
        %p476 = pneg %p164
        %p477 = pneg %p188
        %p478 = pneg %p185
        %p479 = pneg %p209
        %p480 = pneg %p206
        %p481 = pneg %p230
        %p482 = pneg %p227
        %p483 = pneg %p251
        %p484 = pneg %p248
        %p485 = pneg %p272
        %p486 = pneg %p269
        %p487 = pneg %p298
        %p488 = pneg %p295
        %s489 = sand.u32 %s285, 1
        %s490 = scalar_lea.sflag [#allocation6], %s489
        %s491 = sand.u32 %s285, 1
        %s492 = smul.addr %s491, 4
        %s493 = scalar_lea.vmem [#allocation15], %s492
        %p494 = scmp.lt.s32.totalorder %s36, 1
        %s495 = scalar_select %p494, %s36, 1
        %s496 = scalar_lea.vmem %s2, %s495
        %s498 = sld [smem:[#allocation3 + %s36]]
        %p499 = scmp.ne.s32.totalorder %s498, 0
        %p500 = scmp.eq.s32.totalorder %s498, 0
        // Predicated region
        $region89: #{tpu_custom_call.1} parent=63 // pred_check
          %p501 = pneg %p500
        $region90: #{tpu_custom_call.1} parent=63 // pred_check_branch
          %503 = sbr.rel (%p501) target = $region92
        $region91: #{tpu_custom_call.1} parent=63 // pred_region
          %504 = vst [vmem:[%s493] sm:$0xf] 0.0
        $region92: #{tpu_custom_call.1} parent=63 // pred_fallthru
          _
        // Predicated region
        $region93: #{tpu_custom_call.1} parent=63 // pred_check
          %p505 = pneg %p499
        $region94: #{tpu_custom_call.1} parent=63 // pred_check_branch
          %507 = sbr.rel (%p505) target = $region96
        $region95: #{tpu_custom_call.1} parent=63 // pred_region
          %v508 = vld [vmem:[%s432] sm:$0xff]
          %v509 = vld [vmem:[%s432 + $0x8] sm:$0xff]
          %v510 = vpack.c.bf16 %v509, %v508
          %v511 = vld [vmem:[#allocation9] sm:$0xf]
          %v512 = vld [vmem:[#allocation9 + $0x4] sm:$0xf]
          %v513 = vld [vmem:[#allocation9 + $0x8] sm:$0xf]
          %v514 = vld [vmem:[#allocation9 + $0xc] sm:$0xf]
          %v515 = vld [vmem:[#allocation9 + $0x10] sm:$0xf]
          %v516 = vld [vmem:[#allocation9 + $0x14] sm:$0xf]
          %v517 = vld [vmem:[#allocation9 + $0x18] sm:$0xf]
          %v518 = vld [vmem:[#allocation9 + $0x1c] sm:$0xf]
          %v519 = vld [vmem:[#allocation9 + $0x20] sm:$0xf]
          %v520 = vld [vmem:[#allocation9 + $0x24] sm:$0xf]
          %v521 = vld [vmem:[#allocation9 + $0x28] sm:$0xf]
          %v522 = vld [vmem:[#allocation9 + $0x2c] sm:$0xf]
          %v523 = vld [vmem:[#allocation9 + $0x30] sm:$0xf]
          %v524 = vld [vmem:[#allocation9 + $0x34] sm:$0xf]
          %v525 = vld [vmem:[#allocation9 + $0x38] sm:$0xf]
          %v526 = vld [vmem:[#allocation9 + $0x3c] sm:$0xf]
          %v527 = vld [vmem:[%s7] sm:$0x1]
          %v529 = vlaneseq
          %v530 = vshrl.u32 %v529, 7
          %v531 = vsub.s32 0, %v530
          %v532 = vrot.slane %v527, %v531
          %v550 = vunpack.c.l.b16 %v511
          %v551 = vunpack.c.l.b16 %v512
          %v552 = vunpack.c.l.b16 %v513
          %v553 = vunpack.c.l.b16 %v514
          %v554 = vunpack.c.l.b16 %v515
          %v555 = vunpack.c.l.b16 %v516
          %v556 = vunpack.c.l.b16 %v517
          %v557 = vunpack.c.l.b16 %v518
          %v558 = vunpack.c.l.b16 %v519
          %v559 = vunpack.c.l.b16 %v520
          %v560 = vunpack.c.l.b16 %v521
          %v561 = vunpack.c.l.b16 %v522
          %v562 = vunpack.c.l.b16 %v523
          %v563 = vunpack.c.l.b16 %v524
          %v564 = vunpack.c.l.b16 %v525
          %v565 = vunpack.c.l.b16 %v526
          %v566 = vpack.c.b16 %v551, %v550
          %v567 = vpack.c.b16 %v553, %v552
          %v568 = vpack.c.b16 %v555, %v554
          %v569 = vpack.c.b16 %v557, %v556
          %v570 = vpack.c.b16 %v559, %v558
          %v571 = vpack.c.b16 %v561, %v560
          %v572 = vpack.c.b16 %v563, %v562
          %v573 = vpack.c.b16 %v565, %v564
          %582 = vmatprep.subr.bf16.mxu0 0
          %583 = vmatpush1.bf16.msra.mxu0 %v573
          %584 = vmatprep.subr.bf16.mxu0 0
          %585 = vmatpush1.bf16.msra.mxu0 %v572
          %586 = vmatprep.subr.bf16.mxu0 0
          %587 = vmatpush1.bf16.msra.mxu0 %v571
          %588 = vmatprep.subr.bf16.mxu0 0
          %589 = vmatpush1.bf16.msra.mxu0 %v570
          %590 = vmatprep.subr.bf16.mxu0 0
          %591 = vmatpush1.bf16.msra.mxu0 %v569
          %592 = vmatprep.subr.bf16.mxu0 0
          %593 = vmatpush1.bf16.msra.mxu0 %v568
          %594 = vmatprep.subr.bf16.mxu0 0
          %595 = vmatpush1.bf16.msra.mxu0 %v567
          %596 = vmatprep.subr.bf16.mxu0 0
          %597 = vmatpush1.bf16.msra.mxu0 %v566
          %598 = vmatprep.subr.bf16.mxu0 0
          %599 = vmatpush2.bf16.msra.mxu0 0
          %600 = vmatprep.subr.bf16.mxu0 0
          %601 = vmatpush2.bf16.msra.mxu0 0
          %602 = vmatprep.subr.bf16.mxu0 0
          %603 = vmatpush2.bf16.msra.mxu0 0
          %604 = vmatprep.subr.bf16.mxu0 0
          %605 = vmatpush2.bf16.msra.mxu0 0
          %606 = vmatprep.subr.bf16.mxu0 0
          %607 = vmatpush2.bf16.msra.mxu0 0
          %608 = vmatprep.subr.bf16.mxu0 0
          %609 = vmatpush2.bf16.msra.mxu0 0
          %610 = vmatprep.subr.bf16.mxu0 0
          %611 = vmatpush2.bf16.msra.mxu0 0
          %612 = vmatprep.subr.bf16.mxu0 0
          %613 = vmatpush2.bf16.msra.mxu0 0
          %614 = vmatprep.mubr.bf16.mxu0 0
          %615 = vmatmul.mubr.bf16.gmra.mxu0 %v510
          %v616 = vpop.f32.mrf.mxu0
          %v617 = vadd.f32 %v532, %v616
          %v618 = vpop.f32.mrf.mxu0
          %v619 = vpop.f32.mrf.mxu0
          %v620 = vadd.f32 %v532, %v619
          %v621 = vpop.f32.mrf.mxu0
          %622 = vdwg.mxu0
          %v623 = vld [vmem:[#allocation10] sm:$0xf]
          %v624 = vld [vmem:[#allocation10 + $0x4] sm:$0xf]
          %v625 = vld [vmem:[#allocation10 + $0x8] sm:$0xf]
          %v626 = vld [vmem:[#allocation10 + $0xc] sm:$0xf]
          %v627 = vld [vmem:[#allocation10 + $0x10] sm:$0xf]
          %v628 = vld [vmem:[#allocation10 + $0x14] sm:$0xf]
          %v629 = vld [vmem:[#allocation10 + $0x18] sm:$0xf]
          %v630 = vld [vmem:[#allocation10 + $0x1c] sm:$0xf]
          %v631 = vld [vmem:[#allocation10 + $0x20] sm:$0xf]
          %v632 = vld [vmem:[#allocation10 + $0x24] sm:$0xf]
          %v633 = vld [vmem:[#allocation10 + $0x28] sm:$0xf]
          %v634 = vld [vmem:[#allocation10 + $0x2c] sm:$0xf]
          %v635 = vld [vmem:[#allocation10 + $0x30] sm:$0xf]
          %v636 = vld [vmem:[#allocation10 + $0x34] sm:$0xf]
          %v637 = vld [vmem:[#allocation10 + $0x38] sm:$0xf]
          %v638 = vld [vmem:[#allocation10 + $0x3c] sm:$0xf]
          %v639 = vld [vmem:[%s8] sm:$0x1]
          %v641 = vlaneseq
          %v642 = vshrl.u32 %v641, 7
          %v643 = vsub.s32 0, %v642
          %v644 = vrot.slane %v639, %v643
          %v662 = vunpack.c.l.b16 %v623
          %v663 = vunpack.c.l.b16 %v624
          %v664 = vunpack.c.l.b16 %v625
          %v665 = vunpack.c.l.b16 %v626
          %v666 = vunpack.c.l.b16 %v627
          %v667 = vunpack.c.l.b16 %v628
          %v668 = vunpack.c.l.b16 %v629
          %v669 = vunpack.c.l.b16 %v630
          %v670 = vunpack.c.l.b16 %v631
          %v671 = vunpack.c.l.b16 %v632
          %v672 = vunpack.c.l.b16 %v633
          %v673 = vunpack.c.l.b16 %v634
          %v674 = vunpack.c.l.b16 %v635
          %v675 = vunpack.c.l.b16 %v636
          %v676 = vunpack.c.l.b16 %v637
          %v677 = vunpack.c.l.b16 %v638
          %v678 = vpack.c.b16 %v663, %v662
          %v679 = vpack.c.b16 %v665, %v664
          %v680 = vpack.c.b16 %v667, %v666
          %v681 = vpack.c.b16 %v669, %v668
          %v682 = vpack.c.b16 %v671, %v670
          %v683 = vpack.c.b16 %v673, %v672
          %v684 = vpack.c.b16 %v675, %v674
          %v685 = vpack.c.b16 %v677, %v676
          %694 = vmatprep.subr.bf16.mxu0 0
          %695 = vmatpush1.bf16.msra.mxu0 %v685
          %696 = vmatprep.subr.bf16.mxu0 0
          %697 = vmatpush1.bf16.msra.mxu0 %v684
          %698 = vmatprep.subr.bf16.mxu0 0
          %699 = vmatpush1.bf16.msra.mxu0 %v683
          %700 = vmatprep.subr.bf16.mxu0 0
          %701 = vmatpush1.bf16.msra.mxu0 %v682
          %702 = vmatprep.subr.bf16.mxu0 0
          %703 = vmatpush1.bf16.msra.mxu0 %v681
          %704 = vmatprep.subr.bf16.mxu0 0
          %705 = vmatpush1.bf16.msra.mxu0 %v680
          %706 = vmatprep.subr.bf16.mxu0 0
          %707 = vmatpush1.bf16.msra.mxu0 %v679
          %708 = vmatprep.subr.bf16.mxu0 0
          %709 = vmatpush1.bf16.msra.mxu0 %v678
          %710 = vmatprep.subr.bf16.mxu0 0
          %711 = vmatpush2.bf16.msra.mxu0 0
          %712 = vmatprep.subr.bf16.mxu0 0
          %713 = vmatpush2.bf16.msra.mxu0 0
          %714 = vmatprep.subr.bf16.mxu0 0
          %715 = vmatpush2.bf16.msra.mxu0 0
          %716 = vmatprep.subr.bf16.mxu0 0
          %717 = vmatpush2.bf16.msra.mxu0 0
          %718 = vmatprep.subr.bf16.mxu0 0
          %719 = vmatpush2.bf16.msra.mxu0 0
          %720 = vmatprep.subr.bf16.mxu0 0
          %721 = vmatpush2.bf16.msra.mxu0 0
          %722 = vmatprep.subr.bf16.mxu0 0
          %723 = vmatpush2.bf16.msra.mxu0 0
          %724 = vmatprep.subr.bf16.mxu0 0
          %725 = vmatpush2.bf16.msra.mxu0 0
          %726 = vmatprep.mubr.bf16.mxu0 0
          %727 = vmatmul.mubr.bf16.gmra.mxu0 %v510
          %v728 = vpop.f32.mrf.mxu0
          %v729 = vadd.f32 %v644, %v728
          %v730 = vpop.f32.mrf.mxu0
          %v731 = vpop.f32.mrf.mxu0
          %v732 = vadd.f32 %v644, %v731
          %v733 = vpop.f32.mrf.mxu0
          %734 = vdwg.mxu0
          %v735 = vld [vmem:[#allocation7] sm:$0xf]
          %v736 = vld [vmem:[#allocation7 + $0x4] sm:$0xf]
          %v737 = vld [vmem:[#allocation7 + $0x8] sm:$0xf]
          %v738 = vld [vmem:[#allocation7 + $0xc] sm:$0xf]
          %v739 = vpack.c.bf16 %v620, %v617
          %v740 = vld [vmem:[%s496] sm:$0x1]
          %v742 = vlaneseq
          %v743 = vshrl.u32 %v742, 7
          %v744 = vsub.s32 0, %v743
          %v745 = vrot.slane %v740, %v744
          %v751 = vunpack.c.l.b16 %v735
          %v752 = vunpack.c.l.b16 %v736
          %v753 = vunpack.c.l.b16 %v737
          %v754 = vunpack.c.l.b16 %v738
          %v755 = vpack.c.b16 %v752, %v751
          %v756 = vpack.c.b16 %v754, %v753
          %759 = vmatprep.subr.bf16.mxu0 0
          %760 = vmatpush1.bf16.xpose.msra.mxu0 0
          %761 = vmatprep.subr.bf16.mxu0 0
          %762 = vmatpush1.bf16.xpose.msra.mxu0 0
          %763 = vmatprep.subr.bf16.mxu0 0
          %764 = vmatpush1.bf16.xpose.msra.mxu0 0
          %765 = vmatprep.subr.bf16.mxu0 0
          %766 = vmatpush1.bf16.xpose.msra.mxu0 0
          %767 = vmatprep.subr.bf16.mxu0 0
          %768 = vmatpush1.bf16.xpose.msra.mxu0 0
          %769 = vmatprep.subr.bf16.mxu0 0
          %770 = vmatpush1.bf16.xpose.msra.mxu0 0
          %771 = vmatprep.subr.bf16.mxu0 0
          %772 = vmatpush1.bf16.xpose.msra.mxu0 0
          %773 = vmatprep.subr.bf16.mxu0 0
          %774 = vmatpush1.bf16.xpose.msra.mxu0 %v739
          %775 = vmatprep.subr.bf16.mxu0 0
          %776 = vmatpush2.bf16.xpose.msra.mxu0 0
          %777 = vmatprep.subr.bf16.mxu0 0
          %778 = vmatpush2.bf16.xpose.msra.mxu0 0
          %779 = vmatprep.subr.bf16.mxu0 0
          %780 = vmatpush2.bf16.xpose.msra.mxu0 0
          %781 = vmatprep.subr.bf16.mxu0 0
          %782 = vmatpush2.bf16.xpose.msra.mxu0 0
          %783 = vmatprep.subr.bf16.mxu0 0
          %784 = vmatpush2.bf16.xpose.msra.mxu0 0
          %785 = vmatprep.subr.bf16.mxu0 0
          %786 = vmatpush2.bf16.xpose.msra.mxu0 0
          %787 = vmatprep.subr.bf16.mxu0 0
          %788 = vmatpush2.bf16.xpose.msra.mxu0 0
          %789 = vmatprep.subr.bf16.mxu0 0
          %790 = vmatpush2.bf16.xpose.msra.mxu0 0
          %791 = vmatprep.mubr.bf16.mxu0 0
          %792 = vmatmul.mubr.bf16.gmra.mxu0 %v755
          %v793 = vpop.f32.mrf.mxu0
          %v794 = vadd.f32 %v745, %v793
          %v795 = vpop.f32.mrf.mxu0
          %v796 = vpop.f32.mrf.mxu0
          %v797 = vadd.f32 %v745, %v796
          %v798 = vpop.f32.mrf.mxu0
          %799 = vmatprep.mubr.bf16.mxu0 0
          %800 = vmatmul.mubr.bf16.gmra.mxu0 %v756
          %v801 = vpop.f32.mrf.mxu0
          %v802 = vadd.f32 %v745, %v801
          %v803 = vpop.f32.mrf.mxu0
          %v804 = vpop.f32.mrf.mxu0
          %v805 = vadd.f32 %v745, %v804
          %v806 = vpop.f32.mrf.mxu0
          %807 = vdwg.mxu0
          %vm808 = vcmask 130048
          %v809 = vsel %vm808, %v794, -inf
          %810 = vmax.xlane.f32.xlu0 %v809
          %v811 = vpop.xlane.xlu0 %810
          %v812 = vsel %vm808, %v797, -inf
          %813 = vmax.xlane.f32.xlu0 %v812
          %v814 = vpop.xlane.xlu0 %813
          %v815 = vsel %vm808, %v802, -inf
          %816 = vmax.xlane.f32.xlu0 %v815
          %v817 = vpop.xlane.xlu0 %816
          %v818 = vsel %vm808, %v805, -inf
          %819 = vmax.xlane.f32.xlu0 %v818
          %v820 = vpop.xlane.xlu0 %819
          %v821 = vsub.f32 %v794, %v811
          %v822 = vsub.f32 %v797, %v814
          %v823 = vsub.f32 %v802, %v817
          %v824 = vsub.f32 %v805, %v820
          %v825 = vmul.f32 %v821, 1.442695
          %v826 = vpow.pop %v825
          %v827 = vmul.f32 %v822, 1.442695
          %v828 = vpow.pop %v827
          %v829 = vmul.f32 %v823, 1.442695
          %v830 = vpow.pop %v829
          %v831 = vmul.f32 %v824, 1.442695
          %v832 = vpow.pop %v831
          %v833 = vsel %vm808, %v826, 0.0
          %834 = vadd.xlane.f32.xlu0 %v833
          %v835 = vpop.xlane.xlu0 %834
          %v836 = vsel %vm808, %v828, 0.0
          %837 = vadd.xlane.f32.xlu0 %v836
          %v838 = vpop.xlane.xlu0 %837
          %v839 = vsel %vm808, %v830, 0.0
          %840 = vadd.xlane.f32.xlu0 %v839
          %v841 = vpop.xlane.xlu0 %840
          %v842 = vsel %vm808, %v832, 0.0
          %843 = vadd.xlane.f32.xlu0 %v842
          %v844 = vpop.xlane.xlu0 %843
          %v845 = vrcp.pop %v835
          %v846 = vrcp.pop %v838
          %v847 = vrcp.pop %v841
          %v848 = vrcp.pop %v844
          %v849 = vmul.f32 %v826, %v845
          %v850 = vmul.f32 %v828, %v846
          %v851 = vmul.f32 %v830, %v847
          %v852 = vmul.f32 %v832, %v848
          %v853 = vpack.c.bf16 %v850, %v849
          %v854 = vpack.c.bf16 %v852, %v851
          %v855 = vpack.c.bf16 %v732, %v729
          %v857 = vsel %vm808, %v853, 0
          %v860 = vsel %vm808, %v854, 0
          %862 = vmatprep.subr.bf16.mxu0 0
          %863 = vmatpush1.bf16.msra.mxu0 0
          %864 = vmatprep.subr.bf16.mxu0 0
          %865 = vmatpush1.bf16.msra.mxu0 0
          %866 = vmatprep.subr.bf16.mxu0 0
          %867 = vmatpush1.bf16.msra.mxu0 0
          %868 = vmatprep.subr.bf16.mxu0 0
          %869 = vmatpush1.bf16.msra.mxu0 0
          %870 = vmatprep.subr.bf16.mxu0 0
          %871 = vmatpush1.bf16.msra.mxu0 0
          %872 = vmatprep.subr.bf16.mxu0 0
          %873 = vmatpush1.bf16.msra.mxu0 0
          %874 = vmatprep.subr.bf16.mxu0 0
          %875 = vmatpush1.bf16.msra.mxu0 0
          %876 = vmatprep.subr.bf16.mxu0 0
          %877 = vmatpush1.bf16.msra.mxu0 %v855
          %878 = vmatprep.subr.bf16.mxu0 0
          %879 = vmatpush2.bf16.msra.mxu0 0
          %880 = vmatprep.subr.bf16.mxu0 0
          %881 = vmatpush2.bf16.msra.mxu0 0
          %882 = vmatprep.subr.bf16.mxu0 0
          %883 = vmatpush2.bf16.msra.mxu0 0
          %884 = vmatprep.subr.bf16.mxu0 0
          %885 = vmatpush2.bf16.msra.mxu0 0
          %886 = vmatprep.subr.bf16.mxu0 0
          %887 = vmatpush2.bf16.msra.mxu0 0
          %888 = vmatprep.subr.bf16.mxu0 0
          %889 = vmatpush2.bf16.msra.mxu0 0
          %890 = vmatprep.subr.bf16.mxu0 0
          %891 = vmatpush2.bf16.msra.mxu0 0
          %892 = vmatprep.subr.bf16.mxu0 0
          %893 = vmatpush2.bf16.msra.mxu0 0
          %894 = vmatprep.mubr.bf16.mxu0 0
          %895 = vmatmul.mubr.bf16.gmra.mxu0 %v857
          %v896 = vpop.f32.mrf.mxu0
          %v897 = vadd.f32 0.0, %v896
          %v898 = vpop.f32.mrf.mxu0
          %v899 = vpop.f32.mrf.mxu0
          %v900 = vadd.f32 0.0, %v899
          %v901 = vpop.f32.mrf.mxu0
          %902 = vmatprep.mubr.bf16.mxu0 0
          %903 = vmatmul.mubr.bf16.gmra.mxu0 %v860
          %v904 = vpop.f32.mrf.mxu0
          %v905 = vadd.f32 0.0, %v904
          %v906 = vpop.f32.mrf.mxu0
          %v907 = vpop.f32.mrf.mxu0
          %v908 = vadd.f32 0.0, %v907
          %v909 = vpop.f32.mrf.mxu0
          %910 = vdwg.mxu0
          %v911 = vld [vmem:[#allocation13] sm:$0xff]
          %v912 = vld [vmem:[#allocation13 + $0x8] sm:$0xff]
          %v913 = vld [vmem:[#allocation13 + $0x10] sm:$0xff]
          %v914 = vld [vmem:[#allocation13 + $0x18] sm:$0xff]
          %v915 = vmul.f32 %v897, %v911
          %v916 = vmul.f32 %v900, %v912
          %v917 = vmul.f32 %v905, %v913
          %v918 = vmul.f32 %v908, %v914
          %v919 = vld [vmem:[%s11] sm:$0x3]
          %v920 = vpack.c.bf16 %v916, %v915
          %v921 = vpack.c.bf16 %v918, %v917
          %vm922 = vcmask 261120
          %v924 = vsel %vm922, %v919, 0
          %926 = vmatprep.subr.bf16.mxu0 0
          %927 = vmatpush1.bf16.msra.mxu0 0
          %928 = vmatprep.subr.bf16.mxu0 0
          %929 = vmatpush1.bf16.msra.mxu0 0
          %930 = vmatprep.subr.bf16.mxu0 0
          %931 = vmatpush1.bf16.msra.mxu0 0
          %932 = vmatprep.subr.bf16.mxu0 0
          %933 = vmatpush1.bf16.msra.mxu0 0
          %934 = vmatprep.subr.bf16.mxu0 0
          %935 = vmatpush1.bf16.msra.mxu0 0
          %936 = vmatprep.subr.bf16.mxu0 0
          %937 = vmatpush1.bf16.msra.mxu0 0
          %938 = vmatprep.subr.bf16.mxu0 0
          %939 = vmatpush1.bf16.msra.mxu0 %v921
          %940 = vmatprep.subr.bf16.mxu0 0
          %941 = vmatpush1.bf16.msra.mxu0 %v920
          %942 = vmatprep.subr.bf16.mxu0 0
          %943 = vmatpush2.bf16.msra.mxu0 0
          %944 = vmatprep.subr.bf16.mxu0 0
          %945 = vmatpush2.bf16.msra.mxu0 0
          %946 = vmatprep.subr.bf16.mxu0 0
          %947 = vmatpush2.bf16.msra.mxu0 0
          %948 = vmatprep.subr.bf16.mxu0 0
          %949 = vmatpush2.bf16.msra.mxu0 0
          %950 = vmatprep.subr.bf16.mxu0 0
          %951 = vmatpush2.bf16.msra.mxu0 0
          %952 = vmatprep.subr.bf16.mxu0 0
          %953 = vmatpush2.bf16.msra.mxu0 0
          %954 = vmatprep.subr.bf16.mxu0 0
          %955 = vmatpush2.bf16.msra.mxu0 0
          %956 = vmatprep.subr.bf16.mxu0 0
          %957 = vmatpush2.bf16.msra.mxu0 0
          %958 = vmatprep.mubr.bf16.mxu0 0
          %959 = vmatmul.mubr.bf16.gmra.mxu0 %v924
          %v960 = vpop.f32.mrf.mxu0
          %v961 = vadd.f32 0.0, %v960
          %v962 = vpop.f32.mrf.mxu0
          %v963 = vpop.f32.mrf.mxu0
          %v964 = vpop.f32.mrf.mxu0
          %965 = vdwg.mxu0
          %v966 = vpack.c.bf16 %v961, %v961
          %v967 = vld [vmem:[#allocation12] sm:$0xf]
          %v968 = vld [vmem:[#allocation12 + $0x4] sm:$0xf]
          %v969 = vld [vmem:[#allocation12 + $0x8] sm:$0xf]
          %v970 = vld [vmem:[#allocation12 + $0xc] sm:$0xf]
          %v971 = vld [vmem:[#allocation12 + $0x10] sm:$0xf]
          %v972 = vld [vmem:[#allocation12 + $0x14] sm:$0xf]
          %v973 = vld [vmem:[#allocation12 + $0x18] sm:$0xf]
          %v974 = vld [vmem:[#allocation12 + $0x1c] sm:$0xf]
          %v975 = vld [vmem:[#allocation12 + $0x20] sm:$0xf]
          %v976 = vld [vmem:[#allocation12 + $0x24] sm:$0xf]
          %v977 = vld [vmem:[#allocation12 + $0x28] sm:$0xf]
          %v978 = vld [vmem:[#allocation12 + $0x2c] sm:$0xf]
          %v979 = vld [vmem:[#allocation12 + $0x30] sm:$0xf]
          %v980 = vld [vmem:[#allocation12 + $0x34] sm:$0xf]
          %v981 = vld [vmem:[#allocation12 + $0x38] sm:$0xf]
          %v982 = vld [vmem:[#allocation12 + $0x3c] sm:$0xf]
          %v983 = vld [vmem:[%s9] sm:$0x1]
          %v985 = vlaneseq
          %v986 = vshrl.u32 %v985, 7
          %v987 = vsub.s32 0, %v986
          %v988 = vrot.slane %v983, %v987
          %v1006 = vunpack.c.l.b16 %v967
          %v1007 = vunpack.c.l.b16 %v968
          %v1008 = vunpack.c.l.b16 %v969
          %v1009 = vunpack.c.l.b16 %v970
          %v1010 = vunpack.c.l.b16 %v971
          %v1011 = vunpack.c.l.b16 %v972
          %v1012 = vunpack.c.l.b16 %v973
          %v1013 = vunpack.c.l.b16 %v974
          %v1014 = vunpack.c.l.b16 %v975
          %v1015 = vunpack.c.l.b16 %v976
          %v1016 = vunpack.c.l.b16 %v977
          %v1017 = vunpack.c.l.b16 %v978
          %v1018 = vunpack.c.l.b16 %v979
          %v1019 = vunpack.c.l.b16 %v980
          %v1020 = vunpack.c.l.b16 %v981
          %v1021 = vunpack.c.l.b16 %v982
          %v1022 = vpack.c.b16 %v1007, %v1006
          %v1023 = vpack.c.b16 %v1009, %v1008
          %v1024 = vpack.c.b16 %v1011, %v1010
          %v1025 = vpack.c.b16 %v1013, %v1012
          %v1026 = vpack.c.b16 %v1015, %v1014
          %v1027 = vpack.c.b16 %v1017, %v1016
          %v1028 = vpack.c.b16 %v1019, %v1018
          %v1029 = vpack.c.b16 %v1021, %v1020
          %1038 = vmatprep.subr.bf16.mxu0 0
          %1039 = vmatpush1.bf16.msra.mxu0 %v1029
          %1040 = vmatprep.subr.bf16.mxu0 0
          %1041 = vmatpush1.bf16.msra.mxu0 %v1028
          %1042 = vmatprep.subr.bf16.mxu0 0
          %1043 = vmatpush1.bf16.msra.mxu0 %v1027
          %1044 = vmatprep.subr.bf16.mxu0 0
          %1045 = vmatpush1.bf16.msra.mxu0 %v1026
          %1046 = vmatprep.subr.bf16.mxu0 0
          %1047 = vmatpush1.bf16.msra.mxu0 %v1025
          %1048 = vmatprep.subr.bf16.mxu0 0
          %1049 = vmatpush1.bf16.msra.mxu0 %v1024
          %1050 = vmatprep.subr.bf16.mxu0 0
          %1051 = vmatpush1.bf16.msra.mxu0 %v1023
          %1052 = vmatprep.subr.bf16.mxu0 0
          %1053 = vmatpush1.bf16.msra.mxu0 %v1022
          %1054 = vmatprep.subr.bf16.mxu0 0
          %1055 = vmatpush2.bf16.msra.mxu0 0
          %1056 = vmatprep.subr.bf16.mxu0 0
          %1057 = vmatpush2.bf16.msra.mxu0 0
          %1058 = vmatprep.subr.bf16.mxu0 0
          %1059 = vmatpush2.bf16.msra.mxu0 0
          %1060 = vmatprep.subr.bf16.mxu0 0
          %1061 = vmatpush2.bf16.msra.mxu0 0
          %1062 = vmatprep.subr.bf16.mxu0 0
          %1063 = vmatpush2.bf16.msra.mxu0 0
          %1064 = vmatprep.subr.bf16.mxu0 0
          %1065 = vmatpush2.bf16.msra.mxu0 0
          %1066 = vmatprep.subr.bf16.mxu0 0
          %1067 = vmatpush2.bf16.msra.mxu0 0
          %1068 = vmatprep.subr.bf16.mxu0 0
          %1069 = vmatpush2.bf16.msra.mxu0 0
          %1070 = vmatprep.mubr.bf16.mxu0 0
          %1071 = vmatmul.mubr.bf16.gmra.mxu0 %v966
          %v1072 = vpop.f32.mrf.mxu0
          %v1073 = vadd.f32 %v988, %v1072
          %v1074 = vpop.f32.mrf.mxu0
          %v1075 = vpop.f32.mrf.mxu0
          %v1076 = vpop.f32.mrf.mxu0
          %1077 = vdwg.mxu0
          %1078 = vst [vmem:[%s493] sm:$0xf] %v1073
        $region96: #{tpu_custom_call.1} parent=63 // pred_fallthru
          _
        %s1079 = sand.u32 %s285, 1
        %s1080 = scalar_lea.sflag [#allocation6], %s1079
        %s1081 = sand.u32 %s285, 1
        %s1082 = smul.addr %s1081, 4
        %s1083 = scalar_lea.vmem [#allocation15], %s1082
        // Predicated region
        $region97: #{tpu_custom_call.1} parent=63 // pred_check
          %p1084 = pneg %p295
        $region98: #{tpu_custom_call.1} parent=63 // pred_check_branch
          %1086 = sbr.rel (%p1084) target = $region100
        $region99: #{tpu_custom_call.1} parent=63 // pred_region
          %s1088 = ssub.s32 64, 64
          %1089 = vsyncadd %s1080, %s1088
          %s1090 = smul.addr %s36, 64
          %s1091 = scalar_lea.hbm %s12, %s1090
          %s1093 = sshll.u32 %s1083, 4
          %s1094 = int_to_ptr.vmem [resolvable:$true] %s1093
          %1096 = dma.vmem_to_hbm [thread:$0]  %s1094, 64, %s1091, %s1080
        $region100: #{tpu_custom_call.1} parent=63 // pred_fallthru
          _
      $region64: #{tpu_custom_call.1} parent=5 // pred_fallthru
        _
      %p1097 = scmp.le.s32.totalorder 2, %s31
      // Predicated region
      $region101: #{tpu_custom_call.1} parent=5 // pred_check
        %p1098 = pneg %p1097
      $region102: #{tpu_custom_call.1} parent=5 // pred_check_branch
        %1100 = sbr.rel (%p1098) target = $region104
      $region103: #{tpu_custom_call.1} parent=5 // pred_region
        %s1101 = ssub.s32 %s31, 2
        // Predicated region
        $region105: #{tpu_custom_call.1} parent=103 // pred_check
          %p1102 = pneg %p301
        $region106: #{tpu_custom_call.1} parent=103 // pred_check_branch
          %1104 = sbr.rel (%p1102) target = $region108
        $region107: #{tpu_custom_call.1} parent=103 // pred_region
          %s1105 = sand.u32 %s286, 1
          %s1106 = scalar_lea.sflag [#allocation6], %s1105
          %s1107 = sand.u32 %s286, 1
          %s1108 = smul.addr %s1107, 4
          %s1109 = scalar_lea.vmem [#allocation15], %s1108
          %1110 = dma.done %s1106, 64
        $region108: #{tpu_custom_call.1} parent=103 // pred_fallthru
          _
      $region104: #{tpu_custom_call.1} parent=5 // pred_fallthru
        _
    $region6: #{tpu_custom_call.1} parent=1 // loop_footer
      %s35 = sadd.s32 1, %s31
    $region7: #{tpu_custom_call.1} parent=1 // loop_footer_branch
      %30 = sbr.rel target = $region3
    $region8: #{tpu_custom_call.1} parent=1 // loop_exit
      _
    %1111 = vsyncpa [#allocation5], 1
    %s1112 = scalar_lea.sflag [#allocation5], 1
    %1113 = vsyncpa %s1112, 1
    %1114 = vsyncpa [#allocation8], 1
    %1115 = vsyncpa [#allocation11], 1
    %1116 = vsyncpa [#allocation14], 1
    %1117 = vsyncpa [#allocation6], 1
    %s1118 = scalar_lea.sflag [#allocation6], 1
    %1119 = vsyncpa %s1118, 1

</llo_original>
